<compile_context>
chip_gen: v5e
topology: v5e:2x2
jax: 0.10.0
libtpu: 0.0.40
codegen_flags: <defaults>
</compile_context>

<pallas_src>
import math
import functools

import numpy as np
import jax
import jax.numpy as jnp
from jax import lax
from jax.experimental import pallas as pl
from jax.experimental.pallas import tpu as pltpu


def _round_up(v, m):
    return ((v + m - 1) // m) * m


# ----------------------------------------------------------------------------
# Fused kernel
# ----------------------------------------------------------------------------
def _ipcl_kernel(x_ref, w_ref, b_ref, q_ref, avg_ref, assign_ref, zin_ref,
                 xnorm_ref, xmean_ref, loss_ref, zout_ref,
                 xnorm_q_s, lpos_s, acc_s, z_s, *,
                 T, n_lem, eps, batch_valid, K_total, norm_prototype, z_known):
    p = pl.program_id(0)          # pass index (2 passes on the first batch)
    k = pl.program_id(1)          # queue-tile index
    nk = pl.num_programs(1)
    inv_T = 1.0 / float(T)

    B_pad = xnorm_ref.shape[0]
    TK = q_ref.shape[1]

    # ---- first grid step: encoder + L2-normalize + prototypes + l_pos -----
    @pl.when((p == 0) & (k == 0))
    def _():
        feats = jnp.dot(x_ref[...], w_ref[...],
                        preferred_element_type=jnp.float32) + b_ref[...]
        inv = lax.rsqrt(jnp.maximum(
            jnp.sum(feats * feats, axis=1, keepdims=True), 1e-24))
        x_norm = feats * inv                                    # (B_pad, C_pad)
        xnorm_ref[...] = x_norm
        xnorm_q_s[...] = x_norm.astype(xnorm_q_s.dtype)         # matmul operand

        x_mean = jnp.dot(avg_ref[...], x_norm,
                         preferred_element_type=jnp.float32)    # (NI_pad, C_pad)
        if norm_prototype:
            inv_m = lax.rsqrt(jnp.maximum(
                jnp.sum(x_mean * x_mean, axis=1, keepdims=True), 1e-24))
            x_mean = x_mean * inv_m
        xmean_ref[...] = x_mean

        # lane-dense l_pos: mean_rep = assign @ x_mean, then a rowwise VPU dot.
        mean_rep = jnp.dot(assign_ref[...], x_mean,
                           preferred_element_type=jnp.float32)  # (B_pad, C_pad)
        lpos_s[...] = jnp.sum(x_norm * mean_rep, axis=1, keepdims=True)

        acc_s[0] = 0.0   # running sum(exp(l_neg/T))        (Z pass, first batch)
        acc_s[1] = 0.0   # running sum(log(exp(l_neg/T)+d1)) (loss pass)
        z_s[0] = zin_ref[0]

    # ---- per-tile negatives ------------------------------------------------
    row_valid = lax.broadcasted_iota(jnp.int32, (B_pad, TK), 0) < batch_valid
    col_valid = (k * TK +
                 lax.broadcasted_iota(jnp.int32, (B_pad, TK), 1)) < K_total
    mask = jnp.logical_and(row_valid, col_valid)
    rv1 = lax.broadcasted_iota(jnp.int32, (B_pad, 1), 0) < batch_valid

    l_neg = jnp.dot(xnorm_q_s[...], q_ref[...],
                    preferred_element_type=jnp.float32)         # (B_pad, TK) f32
    neg_e = jnp.exp(l_neg * inv_T)                              # f32 EUP

    c = float(K_total) / float(n_lem)                           # K * Pnt

    def _finalize_loss(Z, d1):
        l_pos = lpos_s[...]
        pos_e = jnp.exp(l_pos * inv_T)
        ln_pmt = l_pos * inv_T - jnp.log(pos_e + d1)
        sum_pmt = jnp.sum(jnp.where(rv1, ln_pmt, 0.0))
        sum_pon = float(batch_valid * K_total) * jnp.log(c * Z) - acc_s[1]
        loss_ref[0] = -(sum_pmt + sum_pon) / float(batch_valid)

    if z_known:
        # Steady state: single pass, Z comes in via SMEM; no Z-sum work at all.
        Z = z_s[0]
        d1 = (c + eps) * Z
        acc_s[1] += jnp.sum(jnp.where(mask, jnp.log(neg_e + d1), 0.0))

        @pl.when(k == nk - 1)
        def _():
            zout_ref[0] = Z
            _finalize_loss(Z, d1)
    else:
        # First batch: pass 0 computes Z, pass 1 computes the loss with it.
        @pl.when(p == 0)
        def _():
            acc_s[0] += jnp.sum(jnp.where(mask, neg_e, 0.0))

            @pl.when(k == nk - 1)
            def _():
                l_pos = lpos_s[...]
                pos_e = jnp.exp(l_pos * inv_T)
                pos_sum = jnp.sum(jnp.where(rv1, pos_e, 0.0))
                z_new = (pos_sum + acc_s[0]) \
                    / float(batch_valid * (K_total + 1)) * float(n_lem)
                z_s[0] = z_new
                zout_ref[0] = z_new

        @pl.when(p == 1)
        def _():
            Z = z_s[0]
            d1 = (c + eps) * Z
            acc_s[1] += jnp.sum(jnp.where(mask, jnp.log(neg_e + d1), 0.0))

            @pl.when(k == nk - 1)
            def _():
                _finalize_loss(Z, d1)


def ipcl_fused_forward(x_flat_p, W_p, b_p, queue_p, avg, assign, z_in, *,
                       T, n_lem, eps, batch_valid, K_total, TK,
                       norm_prototype, z_known,
                       vmem_limit_bytes=32 * 1024 * 1024):
    """Single pallas_call for the whole IPCL hot path, tiled over the queue."""
    B_pad, Din = x_flat_p.shape
    C_pad = W_p.shape[1]
    K_pad = queue_p.shape[1]
    NI_pad = avg.shape[0]
    assert K_pad % TK == 0
    nk = K_pad // TK
    num_passes = 1 if z_known else 2

    kern = functools.partial(
        _ipcl_kernel, T=float(T), n_lem=float(n_lem), eps=float(eps),
        batch_valid=int(batch_valid), K_total=int(K_total),
        norm_prototype=bool(norm_prototype), z_known=bool(z_known))

    return pl.pallas_call(
        kern,
        grid=(num_passes, nk),
        out_shape=(
            jax.ShapeDtypeStruct((B_pad, C_pad), jnp.float32),   # x_norm (padded)
            jax.ShapeDtypeStruct((NI_pad, C_pad), jnp.float32),  # x_mean (padded)
            jax.ShapeDtypeStruct((1,), jnp.float32),             # loss  (SMEM)
            jax.ShapeDtypeStruct((1,), jnp.float32),             # Z out (SMEM)
        ),
        in_specs=[
            pl.BlockSpec((B_pad, Din), lambda p, k: (0, 0)),     # x_flat (resident)
            pl.BlockSpec((Din, C_pad), lambda p, k: (0, 0)),     # W
            pl.BlockSpec((1, C_pad), lambda p, k: (0, 0)),       # b
            pl.BlockSpec((C_pad, TK), lambda p, k: (0, k)),      # queue tile (streamed)
            pl.BlockSpec((NI_pad, B_pad), lambda p, k: (0, 0)),  # avg matrix
            pl.BlockSpec((B_pad, NI_pad), lambda p, k: (0, 0)),  # assignment
            pl.BlockSpec(memory_space=pltpu.MemorySpace.SMEM),   # z_in scalar
        ],
        out_specs=(
            pl.BlockSpec((B_pad, C_pad), lambda p, k: (0, 0)),
            pl.BlockSpec((NI_pad, C_pad), lambda p, k: (0, 0)),
            pl.BlockSpec(memory_space=pltpu.MemorySpace.SMEM),
            pl.BlockSpec(memory_space=pltpu.MemorySpace.SMEM),
        ),
        scratch_shapes=[
            pltpu.VMEM((B_pad, C_pad), queue_p.dtype),  # bf16 x_norm (MXU operand)
            pltpu.VMEM((B_pad, 1), jnp.float32),        # l_pos
            pltpu.SMEM((2,), jnp.float32),              # running sums
            pltpu.SMEM((1,), jnp.float32),              # Z handoff between passes
        ],
        compiler_params=pltpu.CompilerParams(
            dimension_semantics=("arbitrary", "arbitrary"),
            vmem_limit_bytes=int(vmem_limit_bytes)),
    )(x_flat_p, W_p, b_p, queue_p, avg, assign, z_in)


# ----------------------------------------------------------------------------
# In-place circular queue insert (donated buffer -> no full (C, K) rewrite).
# ----------------------------------------------------------------------------
@functools.partial(jax.jit, static_argnames=("n1",), donate_argnums=(0,))
def _queue_insert(queue, new_items, ptr, *, n1):
    new_T = new_items.astype(queue.dtype).T                 # (C_pad, nb)
    q = lax.dynamic_update_slice_in_dim(queue, new_T[:, :n1], ptr, axis=1)
    if n1 < new_T.shape[1]:                                  # wrap-around part
        q = lax.dynamic_update_slice_in_dim(q, new_T[:, n1:], 0, axis=1)
    return q


# ----------------------------------------------------------------------------
# IPCL module (functional JAX glue around the fused Pallas kernel).
# ----------------------------------------------------------------------------
class IPCLPallas:
    # Conservative per-tile queue budget: 4 MiB (x2 for double buffering) fits
    # v5e's 16 MiB scoped default, v6e's 32 MiB and v7x's 64 MiB physical VMEM.
    QUEUE_TILE_BYTES = 4 * 1024 * 1024

    def __init__(self, numTrainFiles, K=128, T=0.07, out_dim=32, n_samples=5,
                 norm_prototype=False, store_prototype=False, in_dim=1024,
                 queue_dtype=jnp.bfloat16, key=None):
        self.numTrainFiles = numTrainFiles
        self.K = K
        self.T = T
        self.out_dim = out_dim
        self.n_samples = n_samples
        self.norm_prototype = norm_prototype
        self.store_prototype = store_prototype
        self.training = True

        # bf16 queue storage / MXU operands (f32 accumulation); f32 elementwise
        # math everywhere (v5e has no bf16 VPU/EUP).  Pass jnp.float32 for
        # bit-parity with the PyTorch reference.
        self.queue_dtype = queue_dtype

        # lane-dense padding of the feature dim.
        self.C_pad = _round_up(out_dim, 128)
        itemsize = np.dtype(queue_dtype).itemsize
        tk_max = max(128, (self.QUEUE_TILE_BYTES // (self.C_pad * itemsize))
                     // 128 * 128)
        self.TK = min(_round_up(K, 128), tk_max)
        self.K_pad = _round_up(K, self.TK)

        k_q, k_w = jax.random.split(key, 2)

        # queue buffer: uniform in [-stdv, stdv], L2-normalized per column,
        # then zero-padded to (C_pad, K_pad).
        stdv = 1.0 / math.sqrt(out_dim / 3)
        queue = jax.random.uniform(k_q, (out_dim, K), dtype=jnp.float32) \
            * (2 * stdv) - stdv
        queue = queue / jnp.maximum(
            jnp.linalg.norm(queue, axis=0, keepdims=True), 1e-12)
        queue_p = jnp.zeros((self.C_pad, self.K_pad), queue_dtype)
        self.queue = queue_p.at[:out_dim, :K].set(queue.astype(queue_dtype))
        self._queue_ptr = 0

        # Synthetic deterministic base encoder: flatten + linear projection.
        # TODO(synk): the real base_encoder is an arbitrary backbone; a linear
        # encoder stands in for it here (hot path = matmul, fused in Pallas).
        W = jax.random.normal(k_w, (in_dim, out_dim), dtype=jnp.float32) \
            * (1.0 / math.sqrt(in_dim))
        self.W = jnp.zeros((in_dim, self.C_pad), jnp.float32).at[:, :out_dim].set(W)
        self.b = jnp.zeros((1, self.C_pad), jnp.float32)

        # Z stays on device; `_z_is_set` is a host-side *static* flag that
        # selects the 1-pass (steady-state) vs 2-pass (first batch) kernel.
        self.Z = jnp.full((1,), -1.0, jnp.float32)
        self._z_is_set = False

        self._group_cache = {}
        self._layout_contiguous = None

    # -------------------------------------------------------------------
    def _check_samples_are_contiguous(self, y, bs):
        # One-time host-side layout decision (labels are tiny).
        n = self.n_samples
        y_np = np.asarray(jax.device_get(y)).reshape(-1, bs // n)
        interleaved = bool((y_np[0] == y_np[1]).all())
        return not interleaved

    def _build_group_matrices(self, bs, bs_pad, contiguous):
        n = self.n_samples
        n_imgs = bs // n
        ni_pad = _round_up(max(n_imgs, 1), 8)
        rows = np.arange(bs)
        groups = rows // n if contiguous else rows % n_imgs
        assign = np.zeros((bs_pad, ni_pad), np.float32)
        assign[rows, groups] = 1.0
        avg = assign.T / float(n)                       # (ni_pad, bs_pad)
        return jnp.asarray(assign), jnp.asarray(avg), n_imgs

    # -------------------------------------------------------------------
    def forward(self, x, y, samples_are_contiguous=None):
        bs = x.shape[0]
        assert bs % self.n_samples == 0
        bs_pad = _round_up(bs, 8)                       # sublane-aligned batch

        if samples_are_contiguous is None:
            # TODO(synk): layout assumed constant across steps (checked once,
            # host-static); the reference re-checks every batch on device.
            if self._layout_contiguous is None:
                self._layout_contiguous = \
                    self._check_samples_are_contiguous(y, bs)
            samples_are_contiguous = self._layout_contiguous

        ck = (bs, bool(samples_are_contiguous))
        if ck not in self._group_cache:
            self._group_cache[ck] = self._build_group_matrices(
                bs, bs_pad, samples_are_contiguous)
        assign, avg, n_imgs = self._group_cache[ck]

        # flatten + pad batch (padded rows are masked inside the kernel)
        x_flat = x.reshape(bs, -1).astype(jnp.float32)
        x_flat_p = jnp.pad(x_flat, ((0, bs_pad - bs), (0, 0)))

        x_norm_p, x_mean_p, loss, z_out = ipcl_fused_forward(
            x_flat_p, self.W, self.b, self.queue, avg, assign, self.Z,
            T=self.T, n_lem=self.numTrainFiles, eps=1e-7,
            batch_valid=bs, K_total=self.K, TK=self.TK,
            norm_prototype=self.norm_prototype, z_known=self._z_is_set)

        # Z stays on device (no host read in the hot path).
        self.Z = z_out
        self._z_is_set = True
        # TODO(synk): the reference prints Z on the first batch; skipped here to
        # avoid a device->host sync.

        x_norm = x_norm_p[:bs, :self.out_dim]
        x_mean = x_mean_p[:n_imgs, :self.out_dim]

        if self.training:
            # TODO(synk): distributed concat_all_gather path omitted (single device).
            # Circular in-place insert (negative ordering is irrelevant to the
            # loss, so this is equivalent to the reference FIFO concat).
            new_items = x_mean_p[:n_imgs] if self.store_prototype \
                else x_norm_p[:bs]
            nb = new_items.shape[0]
            ptr = self._queue_ptr
            n1 = min(nb, self.K - ptr)
            self.queue = _queue_insert(self.queue, new_items, ptr, n1=n1)
            self._queue_ptr = (ptr + nb) % self.K

        return loss[0], [x_norm, x_mean]


# ----------------------------------------------------------------------------
if __name__ == "__main__":
    key = jax.random.PRNGKey(0)
    k_x, k_model = jax.random.split(key)

    n_samples = 5
    n_imgs = 2
    B = n_samples * n_imgs          # 10
    C_in, H, W_sp = 4, 16, 16       # NCHW cochleagram input
    out_dim = 32
    K = 128
    numTrainFiles = 100

    x = jax.random.normal(k_x, (B, C_in, H, W_sp), dtype=jnp.float32)
    # interleaved augmentation layout: [img0, img1, img0, img1, ...]
    y = jnp.tile(jnp.arange(n_imgs, dtype=jnp.int32), n_samples)

    model = IPCLPallas(numTrainFiles, K=K, T=0.07, out_dim=out_dim,
                       n_samples=n_samples, in_dim=C_in * H * W_sp,
                       key=k_model)

    # Snapshot params for the host-side float64 reference (before the queue is
    # updated / donated by the first step).
    queue0 = np.asarray(jax.device_get(
        model.queue[:out_dim, :K].astype(jnp.float32)), dtype=np.float64)
    W0 = np.asarray(jax.device_get(model.W[:, :out_dim]), dtype=np.float64)
    b0 = np.asarray(jax.device_get(model.b[:, :out_dim]), dtype=np.float64)

    # ---- first step: 2-pass kernel (computes Z) + circular queue insert ----
    loss, (x_feat, x_mean) = model.forward(x, y)
    jax.block_until_ready((loss, x_feat, x_mean, model.queue, model.Z))

    # ---- host float64 reference of the first forward pass ------------------
    x_np = np.asarray(jax.device_get(x), dtype=np.float64).reshape(B, -1)
    feats = x_np @ W0 + b0
    xn = feats / np.linalg.norm(feats, axis=1, keepdims=True)
    if model._layout_contiguous:
        xm = xn.reshape(-1, n_samples, out_dim).mean(axis=1)
        rep = np.repeat(xm, n_samples, axis=0)
    else:
        xm = xn.reshape(n_samples, B // n_samples, out_dim).mean(axis=0)
        rep = np.tile(xm, (n_samples, 1))
    l_pos = np.sum(xn * rep, axis=1, keepdims=True)
    l_neg = xn @ queue0
    out = np.exp(np.concatenate([l_pos, l_neg], axis=1) / model.T)
    Z_ref = out.mean() * numTrainFiles
    out = out / Z_ref
    Kc = out.shape[1] - 1
    Pn = 1.0 / numTrainFiles
    eps = 1e-7
    lnPmt = np.log(out[:, 0] / (out[:, 0] + Kc * Pn + eps))
    lnPon = np.log((Kc * Pn) / (out[:, 1:] + Kc * Pn + eps))
    loss_ref = -(lnPmt.sum() + lnPon.sum()) / B

    np.testing.assert_allclose(np.asarray(jax.device_get(x_feat), np.float64),
                               xn, rtol=2e-2, atol=2e-2)
    np.testing.assert_allclose(float(loss), float(loss_ref), rtol=1e-1)

    # ---- second step: steady-state single-pass (Z known) path --------------
    loss2, _ = model.forward(x, y)
    jax.block_until_ready(loss2)
    assert np.isfinite(float(loss2))

    print("KERNEL_OK")
</pallas_src>

<mosaic_0001>
module attributes {stable_mosaic.version = 11 : i64} {
  func.func @_ipcl_kernel(%arg0: i32, %arg1: i32, %arg2: memref<16x1024xf32, #tpu.memory_space<vmem>>, %arg3: memref<1024x128xf32, #tpu.memory_space<vmem>>, %arg4: memref<1x128xf32, #tpu.memory_space<vmem>>, %arg5: memref<128x128xbf16, #tpu.memory_space<vmem>>, %arg6: memref<8x16xf32, #tpu.memory_space<vmem>>, %arg7: memref<16x8xf32, #tpu.memory_space<vmem>>, %arg8: memref<1xf32, #tpu.memory_space<smem>>, %arg9: memref<16x128xf32, #tpu.memory_space<vmem>>, %arg10: memref<8x128xf32, #tpu.memory_space<vmem>>, %arg11: memref<1xf32, #tpu.memory_space<smem>>, %arg12: memref<1xf32, #tpu.memory_space<smem>>, %arg13: memref<16x128xbf16, #tpu.memory_space<vmem>>, %arg14: memref<16x1xf32, #tpu.memory_space<vmem>>, %arg15: memref<2xf32, #tpu.memory_space<smem>>, %arg16: memref<1xf32, #tpu.memory_space<smem>>) attributes {dimension_semantics = [#tpu.dimension_semantics<arbitrary>, #tpu.dimension_semantics<arbitrary>], iteration_bounds = array<i64: 2, 1>, scalar_prefetch = 0 : i64, scratch_operands = 4 : i64, tpu.core_type = #tpu.core_type<tc>, window_params = [{pipeline_mode = #tpu.pipeline_mode<synchronous>, transform_indices = @transform_0, window_bounds = array<i64: 16, 1024>}, {pipeline_mode = #tpu.pipeline_mode<synchronous>, transform_indices = @transform_1, window_bounds = array<i64: 1024, 128>}, {pipeline_mode = #tpu.pipeline_mode<synchronous>, transform_indices = @transform_2, window_bounds = array<i64: 1, 128>}, {transform_indices = @transform_3, window_bounds = array<i64: 128, 128>}, {pipeline_mode = #tpu.pipeline_mode<synchronous>, transform_indices = @transform_4, window_bounds = array<i64: 8, 16>}, {pipeline_mode = #tpu.pipeline_mode<synchronous>, transform_indices = @transform_5, window_bounds = array<i64: 16, 8>}, {transform_indices = @transform_6, window_bounds = array<i64: 1>}, {pipeline_mode = #tpu.pipeline_mode<synchronous>, transform_indices = @transform_7, window_bounds = array<i64: 16, 128>}, {pipeline_mode = #tpu.pipeline_mode<synchronous>, transform_indices = @transform_8, window_bounds = array<i64: 8, 128>}, {transform_indices = @transform_9, window_bounds = array<i64: 1>}, {transform_indices = @transform_10, window_bounds = array<i64: 1>}]} {
    %c0_i32 = arith.constant 0 : i32
    %0 = arith.cmpi eq, %arg0, %c0_i32 : i32
    %c0_i32_0 = arith.constant 0 : i32
    %1 = arith.cmpi eq, %arg1, %c0_i32_0 : i32
    %2 = arith.andi %0, %1 : i1
    %3 = arith.extui %2 : i1 to i32
    %c0_i32_1 = arith.constant 0 : i32
    %4 = arith.cmpi ne, %3, %c0_i32_1 : i32
    scf.if %4 {
      %c0_11 = arith.constant 0 : index
      %c0_12 = arith.constant 0 : index
      %30 = vector.load %arg2[%c0_11, %c0_12] : memref<16x1024xf32, #tpu.memory_space<vmem>>, vector<16x1024xf32>
      %c0_13 = arith.constant 0 : index
      %c0_14 = arith.constant 0 : index
      %31 = vector.load %arg3[%c0_13, %c0_14] : memref<1024x128xf32, #tpu.memory_space<vmem>>, vector<1024x128xf32>
      %cst_15 = arith.constant dense<0.000000e+00> : vector<16x128xf32>
      %32 = tpu.matmul %30, %31, %cst_15 {dimension_numbers = #tpu.dot_dimension_numbers<[1], [0], [0], [1], [0, 0, 1, 1], [], []>} : vector<16x1024xf32>, vector<1024x128xf32>, vector<16x128xf32> -> vector<16x128xf32>
      %c0_16 = arith.constant 0 : index
      %c0_17 = arith.constant 0 : index
      %33 = vector.load %arg4[%c0_16, %c0_17] : memref<1x128xf32, #tpu.memory_space<vmem>>, vector<1x128xf32>
      %34 = vector.broadcast %33 : vector<1x128xf32> to vector<16x128xf32>
      %35 = arith.addf %32, %34 : vector<16x128xf32>
      %36 = arith.mulf %35, %35 : vector<16x128xf32>
      %cst_18 = arith.constant dense<0.000000e+00> : vector<16xf32>
      %37 = vector.multi_reduction <add>, %36, %cst_18 [1] : vector<16x128xf32> to vector<16xf32>
      %38 = vector.shape_cast %37 : vector<16xf32> to vector<16x1xf32>
      %cst_19 = arith.constant 1.000000e-24 : f32
      %39 = vector.broadcast %cst_19 : f32 to vector<16x1xf32>
      %40 = arith.maximumf %38, %39 : vector<16x1xf32>
      %41 = math.rsqrt %40 : vector<16x1xf32>
      %42 = vector.broadcast %41 : vector<16x1xf32> to vector<16x128xf32>
      %43 = arith.mulf %35, %42 : vector<16x128xf32>
      %c0_20 = arith.constant 0 : index
      %c0_21 = arith.constant 0 : index
      %44 = vector.load %arg9[%c0_20, %c0_21] : memref<16x128xf32, #tpu.memory_space<vmem>>, vector<16x128xf32>
      tpu.vector_store %arg9[%c0_20, %c0_21], %43 {strides = array<i32>} : memref<16x128xf32, #tpu.memory_space<vmem>>, vector<16x128xf32>,
      %45 = arith.truncf %43 : vector<16x128xf32> to vector<16x128xbf16>
      %c0_22 = arith.constant 0 : index
      %c0_23 = arith.constant 0 : index
      %46 = vector.load %arg13[%c0_22, %c0_23] : memref<16x128xbf16, #tpu.memory_space<vmem>>, vector<16x128xbf16>
      tpu.vector_store %arg13[%c0_22, %c0_23], %45 {strides = array<i32>} : memref<16x128xbf16, #tpu.memory_space<vmem>>, vector<16x128xbf16>,
      %c0_24 = arith.constant 0 : index
      %c0_25 = arith.constant 0 : index
      %47 = vector.load %arg6[%c0_24, %c0_25] : memref<8x16xf32, #tpu.memory_space<vmem>>, vector<8x16xf32>
      %cst_26 = arith.constant dense<0.000000e+00> : vector<8x128xf32>
      %48 = tpu.matmul %47, %43, %cst_26 {dimension_numbers = #tpu.dot_dimension_numbers<[1], [0], [0], [1], [0, 0, 1, 1], [], []>} : vector<8x16xf32>, vector<16x128xf32>, vector<8x128xf32> -> vector<8x128xf32>
      %c0_27 = arith.constant 0 : index
      %c0_28 = arith.constant 0 : index
      %49 = vector.load %arg10[%c0_27, %c0_28] : memref<8x128xf32, #tpu.memory_space<vmem>>, vector<8x128xf32>
      tpu.vector_store %arg10[%c0_27, %c0_28], %48 {strides = array<i32>} : memref<8x128xf32, #tpu.memory_space<vmem>>, vector<8x128xf32>,
      %c0_29 = arith.constant 0 : index
      %c0_30 = arith.constant 0 : index
      %50 = vector.load %arg7[%c0_29, %c0_30] : memref<16x8xf32, #tpu.memory_space<vmem>>, vector<16x8xf32>
      %cst_31 = arith.constant dense<0.000000e+00> : vector<16x128xf32>
      %51 = tpu.matmul %50, %48, %cst_31 {dimension_numbers = #tpu.dot_dimension_numbers<[1], [0], [0], [1], [0, 0, 1, 1], [], []>} : vector<16x8xf32>, vector<8x128xf32>, vector<16x128xf32> -> vector<16x128xf32>
      %52 = arith.mulf %43, %51 : vector<16x128xf32>
      %cst_32 = arith.constant dense<0.000000e+00> : vector<16xf32>
      %53 = vector.multi_reduction <add>, %52, %cst_32 [1] : vector<16x128xf32> to vector<16xf32>
      %54 = vector.shape_cast %53 : vector<16xf32> to vector<16x1xf32>
      %c0_33 = arith.constant 0 : index
      %c0_34 = arith.constant 0 : index
      %55 = vector.load %arg14[%c0_33, %c0_34] : memref<16x1xf32, #tpu.memory_space<vmem>>, vector<16x1xf32>
      tpu.vector_store %arg14[%c0_33, %c0_34], %54 {strides = array<i32>} : memref<16x1xf32, #tpu.memory_space<vmem>>, vector<16x1xf32>,
      %cst_35 = arith.constant 0.000000e+00 : f32
      %c0_36 = arith.constant 0 : index
      %56 = memref.load %arg15[%c0_36] : memref<2xf32, #tpu.memory_space<smem>>
      memref.store %cst_35, %arg15[%c0_36] : memref<2xf32, #tpu.memory_space<smem>>
      %cst_37 = arith.constant 0.000000e+00 : f32
      %c1 = arith.constant 1 : index
      %57 = memref.load %arg15[%c1] : memref<2xf32, #tpu.memory_space<smem>>
      memref.store %cst_37, %arg15[%c1] : memref<2xf32, #tpu.memory_space<smem>>
      %c0_38 = arith.constant 0 : index
      %58 = memref.load %arg8[%c0_38] : memref<1xf32, #tpu.memory_space<smem>>
      %c0_39 = arith.constant 0 : index
      %59 = memref.load %arg16[%c0_39] : memref<1xf32, #tpu.memory_space<smem>>
      memref.store %58, %arg16[%c0_39] : memref<1xf32, #tpu.memory_space<smem>>
    } else {
    }
    %5 = tpu.iota {dimensions = array<i32: 0>} : vector<16x128xi32>
    %c10_i32 = arith.constant 10 : i32
    %6 = vector.broadcast %c10_i32 : i32 to vector<16x128xi32>
    %7 = arith.cmpi slt, %5, %6 : vector<16x128xi32>
    %c128_i32 = arith.constant 128 : i32
    %8 = arith.muli %arg1, %c128_i32 : i32
    %9 = tpu.iota {dimensions = array<i32: 1>} : vector<16x128xi32>
    %10 = vector.broadcast %8 : i32 to vector<16x128xi32>
    %11 = arith.addi %10, %9 : vector<16x128xi32>
    %c128_i32_2 = arith.constant 128 : i32
    %12 = vector.broadcast %c128_i32_2 : i32 to vector<16x128xi32>
    %13 = arith.cmpi slt, %11, %12 : vector<16x128xi32>
    %14 = arith.andi %7, %13 : vector<16x128xi1>
    %15 = tpu.iota {dimensions = array<i32: 0>} : vector<16x1xi32>
    %c10_i32_3 = arith.constant 10 : i32
    %16 = vector.broadcast %c10_i32_3 : i32 to vector<16x1xi32>
    %17 = arith.cmpi slt, %15, %16 : vector<16x1xi32>
    %c0 = arith.constant 0 : index
    %c0_4 = arith.constant 0 : index
    %18 = vector.load %arg13[%c0, %c0_4] : memref<16x128xbf16, #tpu.memory_space<vmem>>, vector<16x128xbf16>
    %c0_5 = arith.constant 0 : index
    %c0_6 = arith.constant 0 : index
    %19 = vector.load %arg5[%c0_5, %c0_6] : memref<128x128xbf16, #tpu.memory_space<vmem>>, vector<128x128xbf16>
    %cst = arith.constant dense<0.000000e+00> : vector<16x128xf32>
    %20 = tpu.matmul %18, %19, %cst {dimension_numbers = #tpu.dot_dimension_numbers<[1], [0], [0], [1], [0, 0, 1, 1], [], []>} : vector<16x128xbf16>, vector<128x128xbf16>, vector<16x128xf32> -> vector<16x128xf32>
    %cst_7 = arith.constant 14.2857141 : f32
    %21 = vector.broadcast %cst_7 : f32 to vector<16x128xf32>
    %22 = arith.mulf %20, %21 : vector<16x128xf32>
    %23 = math.exp %22 : vector<16x128xf32>
    %c0_i32_8 = arith.constant 0 : i32
    %24 = arith.cmpi eq, %arg0, %c0_i32_8 : i32
    %25 = arith.extui %24 : i1 to i32
    %c0_i32_9 = arith.constant 0 : i32
    %26 = arith.cmpi ne, %25, %c0_i32_9 : i32
    scf.if %26 {
      %c0_11 = arith.constant 0 : index
      %30 = memref.load %arg15[%c0_11] : memref<2xf32, #tpu.memory_space<smem>>
      %cst_12 = arith.constant 0.000000e+00 : f32
      %31 = vector.broadcast %cst_12 : f32 to vector<16x128xf32>
      %32 = arith.select %14, %23, %31 : vector<16x128xi1>, vector<16x128xf32>
      %33 = vector.shape_cast %32 : vector<16x128xf32> to vector<1x16x128xf32>
      %cst_13 = arith.constant dense<0.000000e+00> : vector<1xf32>
      %34 = vector.multi_reduction <add>, %33, %cst_13 [1, 2] : vector<1x16x128xf32> to vector<1xf32>
      %35 = vector.shape_cast %34 : vector<1xf32> to vector<1x1x1xf32>
      %36 = vector.extract %35[0, 0, 0] : f32 from vector<1x1x1xf32>
      %37 = arith.addf %30, %36 : f32
      %c0_14 = arith.constant 0 : index
      %38 = memref.load %arg15[%c0_14] : memref<2xf32, #tpu.memory_space<smem>>
      memref.store %37, %arg15[%c0_14] : memref<2xf32, #tpu.memory_space<smem>>
      %c0_i32_15 = arith.constant 0 : i32
      %39 = arith.cmpi eq, %arg1, %c0_i32_15 : i32
      %40 = arith.extui %39 : i1 to i32
      %c0_i32_16 = arith.constant 0 : i32
      %41 = arith.cmpi ne, %40, %c0_i32_16 : i32
      scf.if %41 {
        %c0_17 = arith.constant 0 : index
        %c0_18 = arith.constant 0 : index
        %42 = vector.load %arg14[%c0_17, %c0_18] : memref<16x1xf32, #tpu.memory_space<vmem>>, vector<16x1xf32>
        %cst_19 = arith.constant 14.2857141 : f32
        %43 = vector.broadcast %cst_19 : f32 to vector<16x1xf32>
        %44 = arith.mulf %42, %43 : vector<16x1xf32>
        %45 = math.exp %44 : vector<16x1xf32>
        %cst_20 = arith.constant 0.000000e+00 : f32
        %46 = vector.broadcast %cst_20 : f32 to vector<16x1xf32>
        %47 = arith.select %17, %45, %46 : vector<16x1xi1>, vector<16x1xf32>
        %48 = vector.shape_cast %47 : vector<16x1xf32> to vector<1x16x1xf32>
        %cst_21 = arith.constant dense<0.000000e+00> : vector<1xf32>
        %49 = vector.multi_reduction <add>, %48, %cst_21 [1, 2] : vector<1x16x1xf32> to vector<1xf32>
        %50 = vector.shape_cast %49 : vector<1xf32> to vector<1x1x1xf32>
        %51 = vector.extract %50[0, 0, 0] : f32 from vector<1x1x1xf32>
        %c0_22 = arith.constant 0 : index
        %52 = memref.load %arg15[%c0_22] : memref<2xf32, #tpu.memory_space<smem>>
        %53 = arith.addf %51, %52 : f32
        %cst_23 = arith.constant 1.290000e+03 : f32
        %54 = arith.divf %53, %cst_23 : f32
        %cst_24 = arith.constant 1.000000e+02 : f32
        %55 = arith.mulf %54, %cst_24 : f32
        %c0_25 = arith.constant 0 : index
        %56 = memref.load %arg16[%c0_25] : memref<1xf32, #tpu.memory_space<smem>>
        memref.store %55, %arg16[%c0_25] : memref<1xf32, #tpu.memory_space<smem>>
        %c0_26 = arith.constant 0 : index
        %57 = memref.load %arg12[%c0_26] : memref<1xf32, #tpu.memory_space<smem>>
        memref.store %55, %arg12[%c0_26] : memref<1xf32, #tpu.memory_space<smem>>
      } else {
      }
    } else {
    }
    %c1_i32 = arith.constant 1 : i32
    %27 = arith.cmpi eq, %arg0, %c1_i32 : i32
    %28 = arith.extui %27 : i1 to i32
    %c0_i32_10 = arith.constant 0 : i32
    %29 = arith.cmpi ne, %28, %c0_i32_10 : i32
    scf.if %29 {
      %c0_11 = arith.constant 0 : index
      %30 = memref.load %arg16[%c0_11] : memref<1xf32, #tpu.memory_space<smem>>
      %cst_12 = arith.constant 1.28000009 : f32
      %31 = arith.mulf %cst_12, %30 : f32
      %c1 = arith.constant 1 : index
      %32 = memref.load %arg15[%c1] : memref<2xf32, #tpu.memory_space<smem>>
      %33 = vector.broadcast %31 : f32 to vector<16x128xf32>
      %34 = arith.addf %23, %33 : vector<16x128xf32>
      %35 = math.log %34 : vector<16x128xf32>
      %cst_13 = arith.constant 0.000000e+00 : f32
      %36 = vector.broadcast %cst_13 : f32 to vector<16x128xf32>
      %37 = arith.select %14, %35, %36 : vector<16x128xi1>, vector<16x128xf32>
      %38 = vector.shape_cast %37 : vector<16x128xf32> to vector<1x16x128xf32>
      %cst_14 = arith.constant dense<0.000000e+00> : vector<1xf32>
      %39 = vector.multi_reduction <add>, %38, %cst_14 [1, 2] : vector<1x16x128xf32> to vector<1xf32>
      %40 = vector.shape_cast %39 : vector<1xf32> to vector<1x1x1xf32>
      %41 = vector.extract %40[0, 0, 0] : f32 from vector<1x1x1xf32>
      %42 = arith.addf %32, %41 : f32
      %c1_15 = arith.constant 1 : index
      %43 = memref.load %arg15[%c1_15] : memref<2xf32, #tpu.memory_space<smem>>
      memref.store %42, %arg15[%c1_15] : memref<2xf32, #tpu.memory_space<smem>>
      %c0_i32_16 = arith.constant 0 : i32
      %44 = arith.cmpi eq, %arg1, %c0_i32_16 : i32
      %45 = arith.extui %44 : i1 to i32
      %c0_i32_17 = arith.constant 0 : i32
      %46 = arith.cmpi ne, %45, %c0_i32_17 : i32
      scf.if %46 {
        %c0_18 = arith.constant 0 : index
        %c0_19 = arith.constant 0 : index
        %47 = vector.load %arg14[%c0_18, %c0_19] : memref<16x1xf32, #tpu.memory_space<vmem>>, vector<16x1xf32>
        %cst_20 = arith.constant 14.2857141 : f32
        %48 = vector.broadcast %cst_20 : f32 to vector<16x1xf32>
        %49 = arith.mulf %47, %48 : vector<16x1xf32>
        %50 = math.exp %49 : vector<16x1xf32>
        %cst_21 = arith.constant 14.2857141 : f32
        %51 = vector.broadcast %cst_21 : f32 to vector<16x1xf32>
        %52 = arith.mulf %47, %51 : vector<16x1xf32>
        %53 = vector.broadcast %31 : f32 to vector<16x1xf32>
        %54 = arith.addf %50, %53 : vector<16x1xf32>
        %55 = math.log %54 : vector<16x1xf32>
        %56 = arith.subf %52, %55 : vector<16x1xf32>
        %cst_22 = arith.constant 0.000000e+00 : f32
        %57 = vector.broadcast %cst_22 : f32 to vector<16x1xf32>
        %58 = arith.select %17, %56, %57 : vector<16x1xi1>, vector<16x1xf32>
        %59 = vector.shape_cast %58 : vector<16x1xf32> to vector<1x16x1xf32>
        %cst_23 = arith.constant dense<0.000000e+00> : vector<1xf32>
        %60 = vector.multi_reduction <add>, %59, %cst_23 [1, 2] : vector<1x16x1xf32> to vector<1xf32>
        %61 = vector.shape_cast %60 : vector<1xf32> to vector<1x1x1xf32>
        %62 = vector.extract %61[0, 0, 0] : f32 from vector<1x1x1xf32>
        %cst_24 = arith.constant 1.280000e+00 : f32
        %63 = arith.mulf %cst_24, %30 : f32
        %64 = math.log %63 : f32
        %cst_25 = arith.constant 1.280000e+03 : f32
        %65 = arith.mulf %cst_25, %64 : f32
        %c1_26 = arith.constant 1 : index
        %66 = memref.load %arg15[%c1_26] : memref<2xf32, #tpu.memory_space<smem>>
        %67 = arith.subf %65, %66 : f32
        %68 = arith.addf %62, %67 : f32
        %cst_27 = arith.constant 0.000000e+00 : f32
        %69 = arith.subf %cst_27, %68 : f32
        %cst_28 = arith.constant 1.000000e+01 : f32
        %70 = arith.divf %69, %cst_28 : f32
        %c0_29 = arith.constant 0 : index
        %71 = memref.load %arg11[%c0_29] : memref<1xf32, #tpu.memory_space<smem>>
        memref.store %70, %arg11[%c0_29] : memref<1xf32, #tpu.memory_space<smem>>
      } else {
      }
    } else {
    }
    return
  }
  func.func @transform_0(%arg0: i32, %arg1: i32) -> (i32, i32) {
    %c0_i32 = arith.constant 0 : i32
    %c0_i32_0 = arith.constant 0 : i32
    %c0_i32_1 = arith.constant 0 : i32
    return %c0_i32, %c0_i32_0 : i32, i32
  }
  func.func @transform_1(%arg0: i32, %arg1: i32) -> (i32, i32) {
    %c0_i32 = arith.constant 0 : i32
    %c0_i32_0 = arith.constant 0 : i32
    %c0_i32_1 = arith.constant 0 : i32
    return %c0_i32, %c0_i32_0 : i32, i32
  }
  func.func @transform_2(%arg0: i32, %arg1: i32) -> (i32, i32) {
    %c0_i32 = arith.constant 0 : i32
    %c0_i32_0 = arith.constant 0 : i32
    %c0_i32_1 = arith.constant 0 : i32
    return %c0_i32, %c0_i32_0 : i32, i32
  }
  func.func @transform_3(%arg0: i32, %arg1: i32) -> (i32, i32) {
    %c0_i32 = arith.constant 0 : i32
    %c0_i32_0 = arith.constant 0 : i32
    return %c0_i32, %arg1 : i32, i32
  }
  func.func @transform_4(%arg0: i32, %arg1: i32) -> (i32, i32) {
    %c0_i32 = arith.constant 0 : i32
    %c0_i32_0 = arith.constant 0 : i32
    %c0_i32_1 = arith.constant 0 : i32
    return %c0_i32, %c0_i32_0 : i32, i32
  }
  func.func @transform_5(%arg0: i32, %arg1: i32) -> (i32, i32) {
    %c0_i32 = arith.constant 0 : i32
    %c0_i32_0 = arith.constant 0 : i32
    %c0_i32_1 = arith.constant 0 : i32
    return %c0_i32, %c0_i32_0 : i32, i32
  }
  func.func @transform_6(%arg0: i32, %arg1: i32) -> i32 {
    %c0_i32 = arith.constant 0 : i32
    %c0_i32_0 = arith.constant 0 : i32
    return %c0_i32 : i32
  }
  func.func @transform_7(%arg0: i32, %arg1: i32) -> (i32, i32) {
    %c0_i32 = arith.constant 0 : i32
    %c0_i32_0 = arith.constant 0 : i32
    %c0_i32_1 = arith.constant 0 : i32
    return %c0_i32, %c0_i32_0 : i32, i32
  }
  func.func @transform_8(%arg0: i32, %arg1: i32) -> (i32, i32) {
    %c0_i32 = arith.constant 0 : i32
    %c0_i32_0 = arith.constant 0 : i32
    %c0_i32_1 = arith.constant 0 : i32
    return %c0_i32, %c0_i32_0 : i32, i32
  }
  func.func @transform_9(%arg0: i32, %arg1: i32) -> i32 {
    %c0_i32 = arith.constant 0 : i32
    %c0_i32_0 = arith.constant 0 : i32
    return %c0_i32 : i32
  }
  func.func @transform_10(%arg0: i32, %arg1: i32) -> i32 {
    %c0_i32 = arith.constant 0 : i32
    %c0_i32_0 = arith.constant 0 : i32
    return %c0_i32 : i32
  }
}

</mosaic_0001>

<llo_original>
// kernel: tpu_custom_call.1
$region0: #{tpu_custom_call.1}
  #allocation0 [shape = 'u32[]', space=smem, size = 0x4, offset = 0x4, fixed_abs, tag = 'smem constant byte address 0x4 - core index']
  #allocation1 [shape = 'u32[72,128]{1,0:T(1,128)}', space=vmem, size = 0x9000, scoped, tag = 'internal scratch']
  #allocation2 [shape = 'bf16[16,128]{1,0:T(8,128)(2,1)}', space=vmem, size = 0x1000, scoped, tag = 'scratch operand']
  #allocation3 [shape = 'f32[16,1]{1,0:T(8,128)}', space=vmem, size = 0x2000, scoped, tag = 'scratch operand']
  #allocation4 [shape = 'f32[2]{0:T(128)}', space=smem, size = 0x200, scoped, tag = 'scratch operand']
  #allocation5 [shape = 'f32[1]{0:T(128)}', space=smem, size = 0x200, scoped, tag = 'scratch operand']
  #allocation6 [shape = 'f32[1]{0:T(128)S(6)}', space=smem, size = 0x200, scoped, tag = 'scoped memory for tpu_custom_call.1']
  %s0 = inlined_call_operand.hbm [shape: f32[16,1024], index: 0, kind: input, shape index: {}]
  %s1 = inlined_call_operand.hbm [shape: f32[1024,128], index: 1, kind: input, shape index: {}]
  %s2 = inlined_call_operand.vmem [shape: f32[1,128], index: 2, kind: input, shape index: {}]
  %s3 = inlined_call_operand.hbm [shape: bf16[128,128], index: 3, kind: input, shape index: {}]
  %s4 = inlined_call_operand.vmem [shape: f32[8,16], index: 4, kind: input, shape index: {}]
  %s5 = inlined_call_operand.vmem [shape: f32[16,8], index: 5, kind: input, shape index: {}]
  %s6 = inlined_call_operand.<no memory space> [shape: f32[1], index: 6, kind: input, shape index: {}]
  %s7 = inlined_call_operand.hbm [shape: f32[16,128], index: 7, kind: output, shape index: {0}]
  %s8 = inlined_call_operand.hbm [shape: f32[8,128], index: 8, kind: output, shape index: {1}]
  %s9 = inlined_call_operand.hbm [shape: f32[1], index: 9, kind: output, shape index: {2}]
  %s10 = inlined_call_operand.hbm [shape: f32[1], index: 10, kind: output, shape index: {3}]
  %11 = xla_tuple %s7, %s8, %s9, %s10
  %s12 = sld [smem:[#allocation0]]
  $region117: #{tpu_custom_call.1} parent=0
    _
  %s14 = ssub.s32 1, %s12
  %s15 = scalar_select 0, %s14, %s12
  %16 = sst [smem:[#allocation6]] %s6
  $region1: #{tpu_custom_call.1} parent=0
    #allocation7 [shape = 'u8[65536]{0}', space=vmem, size = 0x10000, scoped, tag = 'input window, operand 0, single buffered']
    #allocation8 [shape = 's32[2]{0}', space=sflag, size = 0x8, scoped, tag = 'scoped memory for tpu_custom_call.1']
    #allocation9 [shape = 's32[2]{0}', space=sflag, size = 0x8, scoped, tag = 'scoped memory for tpu_custom_call.1']
    #allocation10 [shape = 's32[2]{0}', space=sflag, size = 0x8, scoped, tag = 'scoped memory for tpu_custom_call.1']
    #allocation11 [shape = 'u8[524288]{0}', space=vmem, size = 0x80000, scoped, tag = 'input window, operand 1, single buffered']
    #allocation12 [shape = 's32[1]{0}', space=sflag, size = 0x4, scoped, tag = 'scoped memory for tpu_custom_call.1']
    #allocation13 [shape = 'u8[32768]{0}', space=vmem, size = 0x8000, scoped, tag = 'input window, operand 3, single buffered']
    #allocation14 [shape = 'u8[8192]{0}', space=vmem, size = 0x2000, scoped, tag = 'output window, operand 0, single buffered']
    #allocation15 [shape = 'u8[4096]{0}', space=vmem, size = 0x1000, scoped, tag = 'output window, operand 1, single buffered']
    #allocation16 [shape = 's32[1]{0}', space=sflag, size = 0x4, scoped, tag = 'scoped memory for tpu_custom_call.1']
    #allocation17 [shape = 'u8[512]{0}', space=smem, size = 0x200, scoped, tag = 'output window, operand 2, single buffered']
    #allocation18 [shape = 'u8[512]{0}', space=smem, size = 0x200, scoped, tag = 'output window, operand 3, single buffered']
    #allocation19 [shape = 's32[1]{0}', space=sflag, size = 0x4, scoped, tag = 'scoped memory for tpu_custom_call.1']
    %17 = vsyncpa [#allocation8], 0
    %18 = vsyncpa [#allocation12], 0
    %19 = vsyncpa [#allocation9], 0
    %20 = vsyncpa [#allocation16], 0
    %21 = vsyncpa [#allocation10], 0
    %22 = vsyncpa [#allocation19], 0
    loop: start=0, step=1, limit=4
    $region2: #{tpu_custom_call.1} parent=1 // loop_pre_header
      _
    $region3: #{tpu_custom_call.1} parent=1 // loop_header
      %s24 = sphi 0, %s28
      %p25 = scmp.ge.s32.totalorder %s24, 4
      %s31 = sphi 0, %s43
      %s32 = sphi 0, %s39
      %s33 = sphi 0, %s31
      %s34 = sphi 0, %s32
      %s35 = sphi 0, %s33
      %s36 = sphi 0, %s34
      %s44 = sphi 0, %s44
      %s46 = sphi 0, %s44
      %s47 = sphi 0, %s46
      %s61 = sphi 0, %s47
      %s65 = sphi 0, %s65
      %s67 = sphi 0, %s65
      %s68 = sphi 0, %s67
      %s82 = sphi 0, %s68
      %s86 = sphi 0, %s86
      %s88 = sphi 0, %s86
      %s89 = sphi 0, %s88
      %s103 = sphi 0, %s89
      %s109 = sphi 0, %s111
      %s112 = sphi 0, %s109
      %s113 = sphi 0, %s112
      %s129 = sphi 0, %s113
      %s133 = sphi 0, %s133
      %s135 = sphi 0, %s133
      %s136 = sphi 0, %s135
      %s150 = sphi 0, %s136
      %s154 = sphi 0, %s154
      %s156 = sphi 0, %s154
      %s157 = sphi 0, %s156
      %s171 = sphi 0, %s157
      %s175 = sphi 0, %s175
      %s177 = sphi 0, %s175
      %s178 = sphi 0, %s177
      %s192 = sphi 0, %s178
      %s196 = sphi 0, %s196
      %s198 = sphi 0, %s196
      %s199 = sphi 0, %s198
      %s213 = sphi 0, %s199
      %s217 = sphi 0, %s217
      %s219 = sphi 0, %s217
      %s220 = sphi 0, %s219
      %s234 = sphi 0, %s220
      %s238 = sphi 0, %s238
      %s240 = sphi 0, %s238
      %s241 = sphi 0, %s240
      %s255 = sphi 0, %s241
      %s259 = sphi 0, %s259
      %s261 = sphi 0, %s259
      %s262 = sphi 0, %s261
      %s276 = sphi 0, %s262
    $region4: #{tpu_custom_call.1} parent=1 // loop_header_branch
      %27 = sbr.rel (%p25) target = $region8
    $region5: #{tpu_custom_call.1} parent=1 // loop_body
      %s29 = ssub.s32 %s24, 1
      %s30 = ssub.s32 %s24, 2
      %s37 = sadd.s32 1, %s32
      %p38 = scmp.ge.s32.totalorder %s37, 1
      %s39 = scalar_select %p38, 0, %s37
      %s40 = sadd.s32 1, %s31
      %s41 = scalar_select %p38, %s40, %s31
      %p42 = scmp.ge.s32.totalorder %s41, 2
      %s43 = scalar_select %p42, 0, %s41
      %s45 = sadd.s32 %s44, 1
      %p48 = scmp.eq.s32.totalorder %s24, 1
      %p49 = scmp.ne.s32.totalorder %s44, %s46
      %p50 = scmp.eq.s32.totalorder %s24, 0
      %p51 = por %p49, %p50
      %p52 = scmp.ne.s32.totalorder %s44, %s46
      %p53 = scmp.eq.s32.totalorder %s29, 1
      %p54 = por %p52, %p53
      %p55 = scmp.ne.s32.totalorder %s46, %s47
      %p56 = scmp.eq.s32.totalorder %s29, 0
      %p57 = por %p55, %p56
      %p58 = scmp.ne.s32.totalorder %s46, %s47
      %p59 = scmp.eq.s32.totalorder %s30, 1
      %p60 = por %p58, %p59
      %p62 = scmp.ne.s32.totalorder %s47, %s61
      %p63 = scmp.eq.s32.totalorder %s30, 0
      %p64 = por %p62, %p63
      %s66 = sadd.s32 %s65, 1
      %p69 = scmp.eq.s32.totalorder %s24, 1
      %p70 = scmp.ne.s32.totalorder %s65, %s67
      %p71 = scmp.eq.s32.totalorder %s24, 0
      %p72 = por %p70, %p71
      %p73 = scmp.ne.s32.totalorder %s65, %s67
      %p74 = scmp.eq.s32.totalorder %s29, 1
      %p75 = por %p73, %p74
      %p76 = scmp.ne.s32.totalorder %s67, %s68
      %p77 = scmp.eq.s32.totalorder %s29, 0
      %p78 = por %p76, %p77
      %p79 = scmp.ne.s32.totalorder %s67, %s68
      %p80 = scmp.eq.s32.totalorder %s30, 1
      %p81 = por %p79, %p80
      %p83 = scmp.ne.s32.totalorder %s68, %s82
      %p84 = scmp.eq.s32.totalorder %s30, 0
      %p85 = por %p83, %p84
      %s87 = sadd.s32 %s86, 1
      %p90 = scmp.eq.s32.totalorder %s24, 1
      %p91 = scmp.ne.s32.totalorder %s86, %s88
      %p92 = scmp.eq.s32.totalorder %s24, 0
      %p93 = por %p91, %p92
      %p94 = scmp.ne.s32.totalorder %s86, %s88
      %p95 = scmp.eq.s32.totalorder %s29, 1
      %p96 = por %p94, %p95
      %p97 = scmp.ne.s32.totalorder %s88, %s89
      %p98 = scmp.eq.s32.totalorder %s29, 0
      %p99 = por %p97, %p98
      %p100 = scmp.ne.s32.totalorder %s88, %s89
      %p101 = scmp.eq.s32.totalorder %s30, 1
      %p102 = por %p100, %p101
      %p104 = scmp.ne.s32.totalorder %s89, %s103
      %p105 = scmp.eq.s32.totalorder %s30, 0
      %p106 = por %p104, %p105
      %s107 = ssub.s32 %s32, %s39
      %p108 = scmp.eq.s32.totalorder %s107, 0
      %s110 = sadd.s32 %s109, 1
      %s111 = scalar_select %p108, %s109, %s110
      %p114 = pneg %p108
      %p115 = scmp.eq.s32.totalorder %s24, 1
      %p116 = por %p114, %p115
      %p117 = scmp.ne.s32.totalorder %s109, %s112
      %p118 = scmp.eq.s32.totalorder %s24, 0
      %p119 = por %p117, %p118
      %p120 = scmp.ne.s32.totalorder %s109, %s112
      %p121 = scmp.eq.s32.totalorder %s29, 1
      %p122 = por %p120, %p121
      %p123 = scmp.ne.s32.totalorder %s112, %s113
      %p124 = scmp.eq.s32.totalorder %s29, 0
      %p125 = por %p123, %p124
      %p126 = scmp.ne.s32.totalorder %s112, %s113
      %p127 = scmp.eq.s32.totalorder %s30, 1
      %p128 = por %p126, %p127
      %p130 = scmp.ne.s32.totalorder %s113, %s129
      %p131 = scmp.eq.s32.totalorder %s30, 0
      %p132 = por %p130, %p131
      %s134 = sadd.s32 %s133, 1
      %p137 = scmp.eq.s32.totalorder %s24, 1
      %p138 = scmp.ne.s32.totalorder %s133, %s135
      %p139 = scmp.eq.s32.totalorder %s24, 0
      %p140 = por %p138, %p139
      %p141 = scmp.ne.s32.totalorder %s133, %s135
      %p142 = scmp.eq.s32.totalorder %s29, 1
      %p143 = por %p141, %p142
      %p144 = scmp.ne.s32.totalorder %s135, %s136
      %p145 = scmp.eq.s32.totalorder %s29, 0
      %p146 = por %p144, %p145
      %p147 = scmp.ne.s32.totalorder %s135, %s136
      %p148 = scmp.eq.s32.totalorder %s30, 1
      %p149 = por %p147, %p148
      %p151 = scmp.ne.s32.totalorder %s136, %s150
      %p152 = scmp.eq.s32.totalorder %s30, 0
      %p153 = por %p151, %p152
      %s155 = sadd.s32 %s154, 1
      %p158 = scmp.eq.s32.totalorder %s24, 1
      %p159 = scmp.ne.s32.totalorder %s154, %s156
      %p160 = scmp.eq.s32.totalorder %s24, 0
      %p161 = por %p159, %p160
      %p162 = scmp.ne.s32.totalorder %s154, %s156
      %p163 = scmp.eq.s32.totalorder %s29, 1
      %p164 = por %p162, %p163
      %p165 = scmp.ne.s32.totalorder %s156, %s157
      %p166 = scmp.eq.s32.totalorder %s29, 0
      %p167 = por %p165, %p166
      %p168 = scmp.ne.s32.totalorder %s156, %s157
      %p169 = scmp.eq.s32.totalorder %s30, 1
      %p170 = por %p168, %p169
      %p172 = scmp.ne.s32.totalorder %s157, %s171
      %p173 = scmp.eq.s32.totalorder %s30, 0
      %p174 = por %p172, %p173
      %s176 = sadd.s32 %s175, 1
      %p179 = scmp.eq.s32.totalorder %s24, 1
      %p180 = scmp.ne.s32.totalorder %s175, %s177
      %p181 = scmp.eq.s32.totalorder %s24, 0
      %p182 = por %p180, %p181
      %p183 = scmp.ne.s32.totalorder %s175, %s177
      %p184 = scmp.eq.s32.totalorder %s29, 1
      %p185 = por %p183, %p184
      %p186 = scmp.ne.s32.totalorder %s177, %s178
      %p187 = scmp.eq.s32.totalorder %s29, 0
      %p188 = por %p186, %p187
      %p189 = scmp.ne.s32.totalorder %s177, %s178
      %p190 = scmp.eq.s32.totalorder %s30, 1
      %p191 = por %p189, %p190
      %p193 = scmp.ne.s32.totalorder %s178, %s192
      %p194 = scmp.eq.s32.totalorder %s30, 0
      %p195 = por %p193, %p194
      %s197 = sadd.s32 %s196, 1
      %p200 = scmp.eq.s32.totalorder %s24, 1
      %p201 = scmp.ne.s32.totalorder %s196, %s198
      %p202 = scmp.eq.s32.totalorder %s24, 0
      %p203 = por %p201, %p202
      %p204 = scmp.ne.s32.totalorder %s196, %s198
      %p205 = scmp.eq.s32.totalorder %s29, 1
      %p206 = por %p204, %p205
      %p207 = scmp.ne.s32.totalorder %s198, %s199
      %p208 = scmp.eq.s32.totalorder %s29, 0
      %p209 = por %p207, %p208
      %p210 = scmp.ne.s32.totalorder %s198, %s199
      %p211 = scmp.eq.s32.totalorder %s30, 1
      %p212 = por %p210, %p211
      %p214 = scmp.ne.s32.totalorder %s199, %s213
      %p215 = scmp.eq.s32.totalorder %s30, 0
      %p216 = por %p214, %p215
      %s218 = sadd.s32 %s217, 1
      %p221 = scmp.eq.s32.totalorder %s24, 1
      %p222 = scmp.ne.s32.totalorder %s217, %s219
      %p223 = scmp.eq.s32.totalorder %s24, 0
      %p224 = por %p222, %p223
      %p225 = scmp.ne.s32.totalorder %s217, %s219
      %p226 = scmp.eq.s32.totalorder %s29, 1
      %p227 = por %p225, %p226
      %p228 = scmp.ne.s32.totalorder %s219, %s220
      %p229 = scmp.eq.s32.totalorder %s29, 0
      %p230 = por %p228, %p229
      %p231 = scmp.ne.s32.totalorder %s219, %s220
      %p232 = scmp.eq.s32.totalorder %s30, 1
      %p233 = por %p231, %p232
      %p235 = scmp.ne.s32.totalorder %s220, %s234
      %p236 = scmp.eq.s32.totalorder %s30, 0
      %p237 = por %p235, %p236
      %s239 = sadd.s32 %s238, 1
      %p242 = scmp.eq.s32.totalorder %s24, 1
      %p243 = scmp.ne.s32.totalorder %s238, %s240
      %p244 = scmp.eq.s32.totalorder %s24, 0
      %p245 = por %p243, %p244
      %p246 = scmp.ne.s32.totalorder %s238, %s240
      %p247 = scmp.eq.s32.totalorder %s29, 1
      %p248 = por %p246, %p247
      %p249 = scmp.ne.s32.totalorder %s240, %s241
      %p250 = scmp.eq.s32.totalorder %s29, 0
      %p251 = por %p249, %p250
      %p252 = scmp.ne.s32.totalorder %s240, %s241
      %p253 = scmp.eq.s32.totalorder %s30, 1
      %p254 = por %p252, %p253
      %p256 = scmp.ne.s32.totalorder %s241, %s255
      %p257 = scmp.eq.s32.totalorder %s30, 0
      %p258 = por %p256, %p257
      %s260 = sadd.s32 %s259, 1
      %p263 = scmp.eq.s32.totalorder %s24, 1
      %p264 = scmp.ne.s32.totalorder %s259, %s261
      %p265 = scmp.eq.s32.totalorder %s24, 0
      %p266 = por %p264, %p265
      %p267 = scmp.ne.s32.totalorder %s259, %s261
      %p268 = scmp.eq.s32.totalorder %s29, 1
      %p269 = por %p267, %p268
      %p270 = scmp.ne.s32.totalorder %s261, %s262
      %p271 = scmp.eq.s32.totalorder %s29, 0
      %p272 = por %p270, %p271
      %p273 = scmp.ne.s32.totalorder %s261, %s262
      %p274 = scmp.eq.s32.totalorder %s30, 1
      %p275 = por %p273, %p274
      %p277 = scmp.ne.s32.totalorder %s262, %s276
      %p278 = scmp.eq.s32.totalorder %s30, 0
      %p279 = por %p277, %p278
      %p280 = scmp.le.s32.totalorder 1, %s24
      %p281 = scmp.lt.s32.totalorder %s24, 3
      %p282 = pnand %p280, %p281
      %p283 = pneg %p282
      // Predicated region
      $region9: #{tpu_custom_call.1} parent=5 // pred_check
        _
      $region10: #{tpu_custom_call.1} parent=5 // pred_check_branch
        %285 = sbr.rel (%p282) target = $region12
      $region11: #{tpu_custom_call.1} parent=5 // pred_region
        %s286 = ssub.s32 %s24, 1
        // Predicated region
        $region13: #{tpu_custom_call.1} parent=11 // pred_check
          %p287 = pneg %p57
        $region14: #{tpu_custom_call.1} parent=11 // pred_check_branch
          %289 = sbr.rel (%p287) target = $region16
        $region15: #{tpu_custom_call.1} parent=11 // pred_region
          %291 = vsyncadd [#allocation8], 0
          %s292 = sshll.u32 %s0, 4
          %s293 = int_to_ptr.hbm [resolvable:$true] %s292
          %s294 = sshll.u32 [#allocation7], 4
          %s295 = int_to_ptr.vmem [resolvable:$true] %s294
          %300 = dma.hbm_to_vmem [thread:$0]  %s293, 2048, %s295, [#allocation8], 1024, 1024, 64
        $region16: #{tpu_custom_call.1} parent=11 // pred_fallthru
          _
        // Predicated region
        $region17: #{tpu_custom_call.1} parent=11 // pred_check
          %p301 = pneg %p78
        $region18: #{tpu_custom_call.1} parent=11 // pred_check_branch
          %303 = sbr.rel (%p301) target = $region20
        $region19: #{tpu_custom_call.1} parent=11 // pred_region
          %305 = vsyncadd [#allocation12], 0
          %s306 = sshll.u32 %s1, 4
          %s307 = int_to_ptr.hbm [resolvable:$true] %s306
          %s308 = sshll.u32 [#allocation11], 4
          %s309 = int_to_ptr.vmem [resolvable:$true] %s308
          %314 = dma.hbm_to_vmem [thread:$0]  %s307, 16384, %s309, [#allocation12], 128, 128, 8
        $region20: #{tpu_custom_call.1} parent=11 // pred_fallthru
          _
        // Predicated region
        $region21: #{tpu_custom_call.1} parent=11 // pred_check
          %p315 = pneg %p99
        $region22: #{tpu_custom_call.1} parent=11 // pred_check_branch
          %317 = sbr.rel (%p315) target = $region24
        $region23: #{tpu_custom_call.1} parent=11 // pred_region
          _
        $region24: #{tpu_custom_call.1} parent=11 // pred_fallthru
          _
        // Predicated region
        $region25: #{tpu_custom_call.1} parent=11 // pred_check
          %p318 = pneg %p125
        $region26: #{tpu_custom_call.1} parent=11 // pred_check_branch
          %320 = sbr.rel (%p318) target = $region28
        $region27: #{tpu_custom_call.1} parent=11 // pred_region
          %322 = vsyncadd [#allocation12], 0
          %s323 = smul.addr %s34, 4
          %s324 = scalar_lea.hbm %s3, %s323
          %s325 = sshll.u32 %s324, 4
          %s326 = int_to_ptr.hbm [resolvable:$true] %s325
          %s327 = sshll.u32 [#allocation13], 4
          %s328 = int_to_ptr.vmem [resolvable:$true] %s327
          %333 = dma.hbm_to_vmem [thread:$0]  %s326, 1024, %s328, [#allocation12], 64, 64, 4
        $region28: #{tpu_custom_call.1} parent=11 // pred_fallthru
          _
        // Predicated region
        $region29: #{tpu_custom_call.1} parent=11 // pred_check
          %p334 = pneg %p146
        $region30: #{tpu_custom_call.1} parent=11 // pred_check_branch
          %336 = sbr.rel (%p334) target = $region32
        $region31: #{tpu_custom_call.1} parent=11 // pred_region
          _
        $region32: #{tpu_custom_call.1} parent=11 // pred_fallthru
          _
        // Predicated region
        $region33: #{tpu_custom_call.1} parent=11 // pred_check
          %p337 = pneg %p167
        $region34: #{tpu_custom_call.1} parent=11 // pred_check_branch
          %339 = sbr.rel (%p337) target = $region36
        $region35: #{tpu_custom_call.1} parent=11 // pred_region
          _
        $region36: #{tpu_custom_call.1} parent=11 // pred_fallthru
          _
        // Predicated region
        $region37: #{tpu_custom_call.1} parent=11 // pred_check
          %p340 = pneg %p188
        $region38: #{tpu_custom_call.1} parent=11 // pred_check_branch
          %342 = sbr.rel (%p340) target = $region40
        $region39: #{tpu_custom_call.1} parent=11 // pred_region
          _
        $region40: #{tpu_custom_call.1} parent=11 // pred_fallthru
          _
      $region12: #{tpu_custom_call.1} parent=5 // pred_fallthru
        _
      %p343 = scmp.lt.s32.totalorder %s24, 2
      // Predicated region
      $region41: #{tpu_custom_call.1} parent=5 // pred_check
        %p344 = pneg %p343
      $region42: #{tpu_custom_call.1} parent=5 // pred_check_branch
        %346 = sbr.rel (%p344) target = $region44
      $region43: #{tpu_custom_call.1} parent=5 // pred_region
        _
      $region44: #{tpu_custom_call.1} parent=5 // pred_fallthru
        _
      %p347 = scmp.le.s32.totalorder 1, %s24
      %p348 = scmp.lt.s32.totalorder %s24, 3
      %p349 = pnand %p347, %p348
      %p350 = pneg %p349
      // Predicated region
      $region45: #{tpu_custom_call.1} parent=5 // pred_check
        _
      $region46: #{tpu_custom_call.1} parent=5 // pred_check_branch
        %352 = sbr.rel (%p349) target = $region48
      $region47: #{tpu_custom_call.1} parent=5 // pred_region
        %s353 = ssub.s32 %s24, 1
        // Predicated region
        $region49: #{tpu_custom_call.1} parent=47 // pred_check
          %p354 = pneg %p57
        $region50: #{tpu_custom_call.1} parent=47 // pred_check_branch
          %356 = sbr.rel (%p354) target = $region52
        $region51: #{tpu_custom_call.1} parent=47 // pred_region
          %358 = dma.done [#allocation8], 2048
        $region52: #{tpu_custom_call.1} parent=47 // pred_fallthru
          _
        // Predicated region
        $region53: #{tpu_custom_call.1} parent=47 // pred_check
          %p359 = pneg %p78
        $region54: #{tpu_custom_call.1} parent=47 // pred_check_branch
          %361 = sbr.rel (%p359) target = $region56
        $region55: #{tpu_custom_call.1} parent=47 // pred_region
          %363 = dma.done [#allocation12], 16384
        $region56: #{tpu_custom_call.1} parent=47 // pred_fallthru
          _
        // Predicated region
        $region57: #{tpu_custom_call.1} parent=47 // pred_check
          %p364 = pneg %p125
        $region58: #{tpu_custom_call.1} parent=47 // pred_check_branch
          %366 = sbr.rel (%p364) target = $region60
        $region59: #{tpu_custom_call.1} parent=47 // pred_region
          %368 = dma.done [#allocation12], 1024
        $region60: #{tpu_custom_call.1} parent=47 // pred_fallthru
          _
        %p369 = pneg %p57
        %p370 = pneg %p54
        %p371 = pneg %p78
        %p372 = pneg %p75
        %p373 = pneg %p99
        %p374 = pneg %p96
        %p375 = pneg %p125
        %p376 = pneg %p122
        %p377 = pneg %p146
        %p378 = pneg %p143
        %p379 = pneg %p167
        %p380 = pneg %p164
        %p381 = pneg %p188
        %p382 = pneg %p185
        %p383 = pneg %p209
        %p384 = pneg %p206
        %p385 = pneg %p230
        %p386 = pneg %p227
        %p387 = pneg %p251
        %p388 = pneg %p248
        %p389 = pneg %p272
        %p390 = pneg %p269
        %p391 = scmp.eq.s32.totalorder %s33, 0
        %p392 = scmp.eq.s32.totalorder %s34, 0
        %p393 = pnand %p391, %p392
        %p394 = pneg %p393
        // Predicated region
        $region61: #{tpu_custom_call.1} parent=47 // pred_check
          _
        $region62: #{tpu_custom_call.1} parent=47 // pred_check_branch
          %396 = sbr.rel (%p393) target = $region64
        $region63: #{tpu_custom_call.1} parent=47 // pred_region
          %v397 = vld [vmem:[#allocation7] sm:$0xff]
          %v398 = vld [vmem:[#allocation7 + $0x8] sm:$0xff]
          %v399 = vld [vmem:[#allocation7 + $0x10] sm:$0xff]
          %v400 = vld [vmem:[#allocation7 + $0x18] sm:$0xff]
          %v401 = vld [vmem:[#allocation7 + $0x20] sm:$0xff]
          %v402 = vld [vmem:[#allocation7 + $0x28] sm:$0xff]
          %v403 = vld [vmem:[#allocation7 + $0x30] sm:$0xff]
          %v404 = vld [vmem:[#allocation7 + $0x38] sm:$0xff]
          %v405 = vld [vmem:[#allocation7 + $0x40] sm:$0xff]
          %v406 = vld [vmem:[#allocation7 + $0x48] sm:$0xff]
          %v407 = vld [vmem:[#allocation7 + $0x50] sm:$0xff]
          %v408 = vld [vmem:[#allocation7 + $0x58] sm:$0xff]
          %v409 = vld [vmem:[#allocation7 + $0x60] sm:$0xff]
          %v410 = vld [vmem:[#allocation7 + $0x68] sm:$0xff]
          %v411 = vld [vmem:[#allocation7 + $0x70] sm:$0xff]
          %v412 = vld [vmem:[#allocation7 + $0x78] sm:$0xff]
          %v413 = vld [vmem:[#allocation11] sm:$0xff]
          %v414 = vld [vmem:[#allocation11 + $0x8] sm:$0xff]
          %v415 = vld [vmem:[#allocation11 + $0x10] sm:$0xff]
          %v416 = vld [vmem:[#allocation11 + $0x18] sm:$0xff]
          %v417 = vld [vmem:[#allocation11 + $0x20] sm:$0xff]
          %v418 = vld [vmem:[#allocation11 + $0x28] sm:$0xff]
          %v419 = vld [vmem:[#allocation11 + $0x30] sm:$0xff]
          %v420 = vld [vmem:[#allocation11 + $0x38] sm:$0xff]
          %v421 = vld [vmem:[#allocation11 + $0x40] sm:$0xff]
          %v422 = vld [vmem:[#allocation11 + $0x48] sm:$0xff]
          %v423 = vld [vmem:[#allocation11 + $0x50] sm:$0xff]
          %v424 = vld [vmem:[#allocation11 + $0x58] sm:$0xff]
          %v425 = vld [vmem:[#allocation11 + $0x60] sm:$0xff]
          %v426 = vld [vmem:[#allocation11 + $0x68] sm:$0xff]
          %v427 = vld [vmem:[#allocation11 + $0x70] sm:$0xff]
          %v428 = vld [vmem:[#allocation11 + $0x78] sm:$0xff]
          %v429 = vld [vmem:[#allocation11 + $0x80] sm:$0xff]
          %v430 = vld [vmem:[#allocation11 + $0x88] sm:$0xff]
          %v431 = vld [vmem:[#allocation11 + $0x90] sm:$0xff]
          %v432 = vld [vmem:[#allocation11 + $0x98] sm:$0xff]
          %v433 = vld [vmem:[#allocation11 + $0xa0] sm:$0xff]
          %v434 = vld [vmem:[#allocation11 + $0xa8] sm:$0xff]
          %v435 = vld [vmem:[#allocation11 + $0xb0] sm:$0xff]
          %v436 = vld [vmem:[#allocation11 + $0xb8] sm:$0xff]
          %v437 = vld [vmem:[#allocation11 + $0xc0] sm:$0xff]
          %v438 = vld [vmem:[#allocation11 + $0xc8] sm:$0xff]
          %v439 = vld [vmem:[#allocation11 + $0xd0] sm:$0xff]
          %v440 = vld [vmem:[#allocation11 + $0xd8] sm:$0xff]
          %v441 = vld [vmem:[#allocation11 + $0xe0] sm:$0xff]
          %v442 = vld [vmem:[#allocation11 + $0xe8] sm:$0xff]
          %v443 = vld [vmem:[#allocation11 + $0xf0] sm:$0xff]
          %v444 = vld [vmem:[#allocation11 + $0xf8] sm:$0xff]
          %v445 = vld [vmem:[#allocation11 + $0x100] sm:$0xff]
          %v446 = vld [vmem:[#allocation11 + $0x108] sm:$0xff]
          %v447 = vld [vmem:[#allocation11 + $0x110] sm:$0xff]
          %v448 = vld [vmem:[#allocation11 + $0x118] sm:$0xff]
          %v449 = vld [vmem:[#allocation11 + $0x120] sm:$0xff]
          %v450 = vld [vmem:[#allocation11 + $0x128] sm:$0xff]
          %v451 = vld [vmem:[#allocation11 + $0x130] sm:$0xff]
          %v452 = vld [vmem:[#allocation11 + $0x138] sm:$0xff]
          %v453 = vld [vmem:[#allocation11 + $0x140] sm:$0xff]
          %v454 = vld [vmem:[#allocation11 + $0x148] sm:$0xff]
          %v455 = vld [vmem:[#allocation11 + $0x150] sm:$0xff]
          %v456 = vld [vmem:[#allocation11 + $0x158] sm:$0xff]
          %v457 = vld [vmem:[#allocation11 + $0x160] sm:$0xff]
          %v458 = vld [vmem:[#allocation11 + $0x168] sm:$0xff]
          %v459 = vld [vmem:[#allocation11 + $0x170] sm:$0xff]
          %v460 = vld [vmem:[#allocation11 + $0x178] sm:$0xff]
          %v461 = vld [vmem:[#allocation11 + $0x180] sm:$0xff]
          %v462 = vld [vmem:[#allocation11 + $0x188] sm:$0xff]
          %v463 = vld [vmem:[#allocation11 + $0x190] sm:$0xff]
          %v464 = vld [vmem:[#allocation11 + $0x198] sm:$0xff]
          %v465 = vld [vmem:[#allocation11 + $0x1a0] sm:$0xff]
          %v466 = vld [vmem:[#allocation11 + $0x1a8] sm:$0xff]
          %v467 = vld [vmem:[#allocation11 + $0x1b0] sm:$0xff]
          %v468 = vld [vmem:[#allocation11 + $0x1b8] sm:$0xff]
          %v469 = vld [vmem:[#allocation11 + $0x1c0] sm:$0xff]
          %v470 = vld [vmem:[#allocation11 + $0x1c8] sm:$0xff]
          %v471 = vld [vmem:[#allocation11 + $0x1d0] sm:$0xff]
          %v472 = vld [vmem:[#allocation11 + $0x1d8] sm:$0xff]
          %v473 = vld [vmem:[#allocation11 + $0x1e0] sm:$0xff]
          %v474 = vld [vmem:[#allocation11 + $0x1e8] sm:$0xff]
          %v475 = vld [vmem:[#allocation11 + $0x1f0] sm:$0xff]
          %v476 = vld [vmem:[#allocation11 + $0x1f8] sm:$0xff]
          %v477 = vld [vmem:[#allocation11 + $0x200] sm:$0xff]
          %v478 = vld [vmem:[#allocation11 + $0x208] sm:$0xff]
          %v479 = vld [vmem:[#allocation11 + $0x210] sm:$0xff]
          %v480 = vld [vmem:[#allocation11 + $0x218] sm:$0xff]
          %v481 = vld [vmem:[#allocation11 + $0x220] sm:$0xff]
          %v482 = vld [vmem:[#allocation11 + $0x228] sm:$0xff]
          %v483 = vld [vmem:[#allocation11 + $0x230] sm:$0xff]
          %v484 = vld [vmem:[#allocation11 + $0x238] sm:$0xff]
          %v485 = vld [vmem:[#allocation11 + $0x240] sm:$0xff]
          %v486 = vld [vmem:[#allocation11 + $0x248] sm:$0xff]
          %v487 = vld [vmem:[#allocation11 + $0x250] sm:$0xff]
          %v488 = vld [vmem:[#allocation11 + $0x258] sm:$0xff]
          %v489 = vld [vmem:[#allocation11 + $0x260] sm:$0xff]
          %v490 = vld [vmem:[#allocation11 + $0x268] sm:$0xff]
          %v491 = vld [vmem:[#allocation11 + $0x270] sm:$0xff]
          %v492 = vld [vmem:[#allocation11 + $0x278] sm:$0xff]
          %v493 = vld [vmem:[#allocation11 + $0x280] sm:$0xff]
          %v494 = vld [vmem:[#allocation11 + $0x288] sm:$0xff]
          %v495 = vld [vmem:[#allocation11 + $0x290] sm:$0xff]
          %v496 = vld [vmem:[#allocation11 + $0x298] sm:$0xff]
          %v497 = vld [vmem:[#allocation11 + $0x2a0] sm:$0xff]
          %v498 = vld [vmem:[#allocation11 + $0x2a8] sm:$0xff]
          %v499 = vld [vmem:[#allocation11 + $0x2b0] sm:$0xff]
          %v500 = vld [vmem:[#allocation11 + $0x2b8] sm:$0xff]
          %v501 = vld [vmem:[#allocation11 + $0x2c0] sm:$0xff]
          %v502 = vld [vmem:[#allocation11 + $0x2c8] sm:$0xff]
          %v503 = vld [vmem:[#allocation11 + $0x2d0] sm:$0xff]
          %v504 = vld [vmem:[#allocation11 + $0x2d8] sm:$0xff]
          %v505 = vld [vmem:[#allocation11 + $0x2e0] sm:$0xff]
          %v506 = vld [vmem:[#allocation11 + $0x2e8] sm:$0xff]
          %v507 = vld [vmem:[#allocation11 + $0x2f0] sm:$0xff]
          %v508 = vld [vmem:[#allocation11 + $0x2f8] sm:$0xff]
          %v509 = vld [vmem:[#allocation11 + $0x300] sm:$0xff]
          %v510 = vld [vmem:[#allocation11 + $0x308] sm:$0xff]
          %v511 = vld [vmem:[#allocation11 + $0x310] sm:$0xff]
          %v512 = vld [vmem:[#allocation11 + $0x318] sm:$0xff]
          %v513 = vld [vmem:[#allocation11 + $0x320] sm:$0xff]
          %v514 = vld [vmem:[#allocation11 + $0x328] sm:$0xff]
          %v515 = vld [vmem:[#allocation11 + $0x330] sm:$0xff]
          %v516 = vld [vmem:[#allocation11 + $0x338] sm:$0xff]
          %v517 = vld [vmem:[#allocation11 + $0x340] sm:$0xff]
          %v518 = vld [vmem:[#allocation11 + $0x348] sm:$0xff]
          %v519 = vld [vmem:[#allocation11 + $0x350] sm:$0xff]
          %v520 = vld [vmem:[#allocation11 + $0x358] sm:$0xff]
          %v521 = vld [vmem:[#allocation11 + $0x360] sm:$0xff]
          %v522 = vld [vmem:[#allocation11 + $0x368] sm:$0xff]
          %v523 = vld [vmem:[#allocation11 + $0x370] sm:$0xff]
          %v524 = vld [vmem:[#allocation11 + $0x378] sm:$0xff]
          %v525 = vld [vmem:[#allocation11 + $0x380] sm:$0xff]
          %v526 = vld [vmem:[#allocation11 + $0x388] sm:$0xff]
          %v527 = vld [vmem:[#allocation11 + $0x390] sm:$0xff]
          %v528 = vld [vmem:[#allocation11 + $0x398] sm:$0xff]
          %v529 = vld [vmem:[#allocation11 + $0x3a0] sm:$0xff]
          %v530 = vld [vmem:[#allocation11 + $0x3a8] sm:$0xff]
          %v531 = vld [vmem:[#allocation11 + $0x3b0] sm:$0xff]
          %v532 = vld [vmem:[#allocation11 + $0x3b8] sm:$0xff]
          %v533 = vld [vmem:[#allocation11 + $0x3c0] sm:$0xff]
          %v534 = vld [vmem:[#allocation11 + $0x3c8] sm:$0xff]
          %v535 = vld [vmem:[#allocation11 + $0x3d0] sm:$0xff]
          %v536 = vld [vmem:[#allocation11 + $0x3d8] sm:$0xff]
          %v537 = vld [vmem:[#allocation11 + $0x3e0] sm:$0xff]
          %v538 = vld [vmem:[#allocation11 + $0x3e8] sm:$0xff]
          %v539 = vld [vmem:[#allocation11 + $0x3f0] sm:$0xff]
          %v540 = vld [vmem:[#allocation11 + $0x3f8] sm:$0xff]
          %v541 = vld [vmem:[%s2] sm:$0x1]
          %v543 = vperm.slane %v541, 0
          %545 = vmatpush.msra.mxu0 %v428
          %546 = vmatpush.msra.mxu0 %v427
          %547 = vmatpush.msra.mxu0 %v426
          %548 = vmatpush.msra.mxu0 %v425
          %549 = vmatpush.msra.mxu0 %v424
          %550 = vmatpush.msra.mxu0 %v423
          %551 = vmatpush.msra.mxu0 %v422
          %552 = vmatpush.msra.mxu0 %v421
          %553 = vmatpush.msra.mxu0 %v420
          %554 = vmatpush.msra.mxu0 %v419
          %555 = vmatpush.msra.mxu0 %v418
          %556 = vmatpush.msra.mxu0 %v417
          %557 = vmatpush.msra.mxu0 %v416
          %558 = vmatpush.msra.mxu0 %v415
          %559 = vmatpush.msra.mxu0 %v414
          %560 = vmatpush.msra.mxu0 %v413
          %561 = vmatmul.f32.gmra.mxu0 %v397
          %v562 = vpop.f32.mrf.mxu0
          %v563 = vadd.f32 %v543, %v562
          %564 = vmatmul.f32.gmra.mxu0 %v405
          %v565 = vpop.f32.mrf.mxu0
          %v566 = vadd.f32 %v543, %v565
          %567 = vdwg.mxu0
          %568 = vmatpush.msra.mxu0 %v444
          %569 = vmatpush.msra.mxu0 %v443
          %570 = vmatpush.msra.mxu0 %v442
          %571 = vmatpush.msra.mxu0 %v441
          %572 = vmatpush.msra.mxu0 %v440
          %573 = vmatpush.msra.mxu0 %v439
          %574 = vmatpush.msra.mxu0 %v438
          %575 = vmatpush.msra.mxu0 %v437
          %576 = vmatpush.msra.mxu0 %v436
          %577 = vmatpush.msra.mxu0 %v435
          %578 = vmatpush.msra.mxu0 %v434
          %579 = vmatpush.msra.mxu0 %v433
          %580 = vmatpush.msra.mxu0 %v432
          %581 = vmatpush.msra.mxu0 %v431
          %582 = vmatpush.msra.mxu0 %v430
          %583 = vmatpush.msra.mxu0 %v429
          %584 = vmatmul.f32.gmra.mxu0 %v398
          %v585 = vpop.f32.mrf.mxu0
          %v586 = vadd.f32 %v563, %v585
          %587 = vmatmul.f32.gmra.mxu0 %v406
          %v588 = vpop.f32.mrf.mxu0
          %v589 = vadd.f32 %v566, %v588
          %590 = vdwg.mxu0
          %591 = vmatpush.msra.mxu0 %v460
          %592 = vmatpush.msra.mxu0 %v459
          %593 = vmatpush.msra.mxu0 %v458
          %594 = vmatpush.msra.mxu0 %v457
          %595 = vmatpush.msra.mxu0 %v456
          %596 = vmatpush.msra.mxu0 %v455
          %597 = vmatpush.msra.mxu0 %v454
          %598 = vmatpush.msra.mxu0 %v453
          %599 = vmatpush.msra.mxu0 %v452
          %600 = vmatpush.msra.mxu0 %v451
          %601 = vmatpush.msra.mxu0 %v450
          %602 = vmatpush.msra.mxu0 %v449
          %603 = vmatpush.msra.mxu0 %v448
          %604 = vmatpush.msra.mxu0 %v447
          %605 = vmatpush.msra.mxu0 %v446
          %606 = vmatpush.msra.mxu0 %v445
          %607 = vmatmul.f32.gmra.mxu0 %v399
          %v608 = vpop.f32.mrf.mxu0
          %v609 = vadd.f32 %v586, %v608
          %610 = vmatmul.f32.gmra.mxu0 %v407
          %v611 = vpop.f32.mrf.mxu0
          %v612 = vadd.f32 %v589, %v611
          %613 = vdwg.mxu0
          %614 = vmatpush.msra.mxu0 %v476
          %615 = vmatpush.msra.mxu0 %v475
          %616 = vmatpush.msra.mxu0 %v474
          %617 = vmatpush.msra.mxu0 %v473
          %618 = vmatpush.msra.mxu0 %v472
          %619 = vmatpush.msra.mxu0 %v471
          %620 = vmatpush.msra.mxu0 %v470
          %621 = vmatpush.msra.mxu0 %v469
          %622 = vmatpush.msra.mxu0 %v468
          %623 = vmatpush.msra.mxu0 %v467
          %624 = vmatpush.msra.mxu0 %v466
          %625 = vmatpush.msra.mxu0 %v465
          %626 = vmatpush.msra.mxu0 %v464
          %627 = vmatpush.msra.mxu0 %v463
          %628 = vmatpush.msra.mxu0 %v462
          %629 = vmatpush.msra.mxu0 %v461
          %630 = vmatmul.f32.gmra.mxu0 %v400
          %v631 = vpop.f32.mrf.mxu0
          %v632 = vadd.f32 %v609, %v631
          %633 = vmatmul.f32.gmra.mxu0 %v408
          %v634 = vpop.f32.mrf.mxu0
          %v635 = vadd.f32 %v612, %v634
          %636 = vdwg.mxu0
          %637 = vmatpush.msra.mxu0 %v492
          %638 = vmatpush.msra.mxu0 %v491
          %639 = vmatpush.msra.mxu0 %v490
          %640 = vmatpush.msra.mxu0 %v489
          %641 = vmatpush.msra.mxu0 %v488
          %642 = vmatpush.msra.mxu0 %v487
          %643 = vmatpush.msra.mxu0 %v486
          %644 = vmatpush.msra.mxu0 %v485
          %645 = vmatpush.msra.mxu0 %v484
          %646 = vmatpush.msra.mxu0 %v483
          %647 = vmatpush.msra.mxu0 %v482
          %648 = vmatpush.msra.mxu0 %v481
          %649 = vmatpush.msra.mxu0 %v480
          %650 = vmatpush.msra.mxu0 %v479
          %651 = vmatpush.msra.mxu0 %v478
          %652 = vmatpush.msra.mxu0 %v477
          %653 = vmatmul.f32.gmra.mxu0 %v401
          %v654 = vpop.f32.mrf.mxu0
          %v655 = vadd.f32 %v632, %v654
          %656 = vmatmul.f32.gmra.mxu0 %v409
          %v657 = vpop.f32.mrf.mxu0
          %v658 = vadd.f32 %v635, %v657
          %659 = vdwg.mxu0
          %660 = vmatpush.msra.mxu0 %v508
          %661 = vmatpush.msra.mxu0 %v507
          %662 = vmatpush.msra.mxu0 %v506
          %663 = vmatpush.msra.mxu0 %v505
          %664 = vmatpush.msra.mxu0 %v504
          %665 = vmatpush.msra.mxu0 %v503
          %666 = vmatpush.msra.mxu0 %v502
          %667 = vmatpush.msra.mxu0 %v501
          %668 = vmatpush.msra.mxu0 %v500
          %669 = vmatpush.msra.mxu0 %v499
          %670 = vmatpush.msra.mxu0 %v498
          %671 = vmatpush.msra.mxu0 %v497
          %672 = vmatpush.msra.mxu0 %v496
          %673 = vmatpush.msra.mxu0 %v495
          %674 = vmatpush.msra.mxu0 %v494
          %675 = vmatpush.msra.mxu0 %v493
          %676 = vmatmul.f32.gmra.mxu0 %v402
          %v677 = vpop.f32.mrf.mxu0
          %v678 = vadd.f32 %v655, %v677
          %679 = vmatmul.f32.gmra.mxu0 %v410
          %v680 = vpop.f32.mrf.mxu0
          %v681 = vadd.f32 %v658, %v680
          %682 = vdwg.mxu0
          %683 = vmatpush.msra.mxu0 %v524
          %684 = vmatpush.msra.mxu0 %v523
          %685 = vmatpush.msra.mxu0 %v522
          %686 = vmatpush.msra.mxu0 %v521
          %687 = vmatpush.msra.mxu0 %v520
          %688 = vmatpush.msra.mxu0 %v519
          %689 = vmatpush.msra.mxu0 %v518
          %690 = vmatpush.msra.mxu0 %v517
          %691 = vmatpush.msra.mxu0 %v516
          %692 = vmatpush.msra.mxu0 %v515
          %693 = vmatpush.msra.mxu0 %v514
          %694 = vmatpush.msra.mxu0 %v513
          %695 = vmatpush.msra.mxu0 %v512
          %696 = vmatpush.msra.mxu0 %v511
          %697 = vmatpush.msra.mxu0 %v510
          %698 = vmatpush.msra.mxu0 %v509
          %699 = vmatmul.f32.gmra.mxu0 %v403
          %v700 = vpop.f32.mrf.mxu0
          %v701 = vadd.f32 %v678, %v700
          %702 = vmatmul.f32.gmra.mxu0 %v411
          %v703 = vpop.f32.mrf.mxu0
          %v704 = vadd.f32 %v681, %v703
          %705 = vdwg.mxu0
          %706 = vmatpush.msra.mxu0 %v540
          %707 = vmatpush.msra.mxu0 %v539
          %708 = vmatpush.msra.mxu0 %v538
          %709 = vmatpush.msra.mxu0 %v537
          %710 = vmatpush.msra.mxu0 %v536
          %711 = vmatpush.msra.mxu0 %v535
          %712 = vmatpush.msra.mxu0 %v534
          %713 = vmatpush.msra.mxu0 %v533
          %714 = vmatpush.msra.mxu0 %v532
          %715 = vmatpush.msra.mxu0 %v531
          %716 = vmatpush.msra.mxu0 %v530
          %717 = vmatpush.msra.mxu0 %v529
          %718 = vmatpush.msra.mxu0 %v528
          %719 = vmatpush.msra.mxu0 %v527
          %720 = vmatpush.msra.mxu0 %v526
          %721 = vmatpush.msra.mxu0 %v525
          %722 = vmatmul.f32.gmra.mxu0 %v404
          %v723 = vpop.f32.mrf.mxu0
          %v724 = vadd.f32 %v701, %v723
          %725 = vmatmul.f32.gmra.mxu0 %v412
          %v726 = vpop.f32.mrf.mxu0
          %v727 = vadd.f32 %v704, %v726
          %728 = vdwg.mxu0
          %v729 = vmul.f32 %v724, %v724
          %v730 = vmul.f32 %v727, %v727
          %731 = vadd.xlane.f32.xlu0 %v729
          %v732 = vpop.xlane.xlu0 %731
          %733 = vadd.xlane.f32.xlu0 %v730
          %v734 = vpop.xlane.xlu0 %733
          %v735 = vmax.f32 %v732, 1e-24
          %v736 = vmax.f32 %v734, 1e-24
          %v737 = vrsqrt.pop %v735
          %v738 = vmul.f32 %v737, %v735
          %v739 = vmul.f32 %v738, %v737
          %v740 = vmul.f32 0.5, %v739
          %v741 = vsub.f32 1.5, %v740
          %v742 = vmul.f32 %v737, %v741
          %vm743 = vweird.f32 %v735
          %vm744 = vweird.f32 %v737
          %vm745 = vmor %vm743, %vm744
          %v746 = vsel %vm745, %v737, %v742
          %v747 = vrsqrt.pop %v736
          %v748 = vmul.f32 %v747, %v736
          %v749 = vmul.f32 %v748, %v747
          %v750 = vmul.f32 0.5, %v749
          %v751 = vsub.f32 1.5, %v750
          %v752 = vmul.f32 %v747, %v751
          %vm753 = vweird.f32 %v736
          %vm754 = vweird.f32 %v747
          %vm755 = vmor %vm753, %vm754
          %v756 = vsel %vm755, %v747, %v752
          %v757 = vmul.f32 %v724, %v746
          %v758 = vmul.f32 %v727, %v756
          %759 = vst [vmem:[#allocation14] sm:$0xff] %v757
          %760 = vst [vmem:[#allocation14 + $0x8] sm:$0xff] %v758
          %v761 = vpack.c.bf16 %v757, %v757
          %v762 = vpack.c.bf16 %v758, %v758
          %763 = vst [vmem:[#allocation2] sm:$0xf] %v761
          %764 = vst [vmem:[#allocation2 + $0x4] sm:$0xf] %v762
          %v765 = vld [vmem:[%s4] sm:$0xff]
          %vm766 = vcmask 130048
          %v768 = vsel %vm766, %v765, 0
          %770 = vmatpush.msra.mxu0 0.0
          %771 = vmatpush.msra.mxu0 0.0
          %772 = vmatpush.msra.mxu0 0.0
          %773 = vmatpush.msra.mxu0 0.0
          %774 = vmatpush.msra.mxu0 0.0
          %775 = vmatpush.msra.mxu0 0.0
          %776 = vmatpush.msra.mxu0 0.0
          %777 = vmatpush.msra.mxu0 0.0
          %778 = vmatpush.msra.mxu0 0.0
          %779 = vmatpush.msra.mxu0 0.0
          %780 = vmatpush.msra.mxu0 0.0
          %781 = vmatpush.msra.mxu0 0.0
          %782 = vmatpush.msra.mxu0 0.0
          %783 = vmatpush.msra.mxu0 0.0
          %784 = vmatpush.msra.mxu0 %v758
          %785 = vmatpush.msra.mxu0 %v757
          %786 = vmatmul.f32.gmra.mxu0 %v768
          %v787 = vpop.f32.mrf.mxu0
          %v788 = vadd.f32 0.0, %v787
          %789 = vdwg.mxu0
          %790 = vst [vmem:[#allocation15] sm:$0xff] %v788
          %v791 = vld [vmem:[%s5] sm:$0xff]
          %v792 = vld [vmem:[%s5 + $0x8] sm:$0xff]
          %vm793 = vcmask 64512
          %v795 = vsel %vm793, %v791, 0
          %v798 = vsel %vm793, %v792, 0
          %800 = vmatpush.msra.mxu0 0.0
          %801 = vmatpush.msra.mxu0 0.0
          %802 = vmatpush.msra.mxu0 0.0
          %803 = vmatpush.msra.mxu0 0.0
          %804 = vmatpush.msra.mxu0 0.0
          %805 = vmatpush.msra.mxu0 0.0
          %806 = vmatpush.msra.mxu0 0.0
          %807 = vmatpush.msra.mxu0 0.0
          %808 = vmatpush.msra.mxu0 0.0
          %809 = vmatpush.msra.mxu0 0.0
          %810 = vmatpush.msra.mxu0 0.0
          %811 = vmatpush.msra.mxu0 0.0
          %812 = vmatpush.msra.mxu0 0.0
          %813 = vmatpush.msra.mxu0 0.0
          %814 = vmatpush.msra.mxu0 0.0
          %815 = vmatpush.msra.mxu0 %v788
          %816 = vmatmul.f32.gmra.mxu0 %v795
          %v817 = vpop.f32.mrf.mxu0
          %v818 = vadd.f32 0.0, %v817
          %819 = vmatmul.f32.gmra.mxu0 %v798
          %v820 = vpop.f32.mrf.mxu0
          %v821 = vadd.f32 0.0, %v820
          %822 = vdwg.mxu0
          %v823 = vmul.f32 %v757, %v818
          %v824 = vmul.f32 %v758, %v821
          %825 = vadd.xlane.f32.xlu0 %v823
          %v826 = vpop.xlane.xlu0 %825
          %827 = vadd.xlane.f32.xlu0 %v824
          %v828 = vpop.xlane.xlu0 %827
          %vm829 = vcmask 7168
          %830 = vst.msk [vmem:[#allocation3] sm:$0xff] %vm829, %v826
          %831 = vst.msk [vmem:[#allocation3 + $0x8] sm:$0xff] %vm829, %v828
          %s832 = scalar_lea.smem [#allocation4], 0
          %833 = sst [smem:[%s832]] 0.0
          %s834 = scalar_lea.smem [#allocation4], 1
          %835 = sst [smem:[%s834]] 0.0
          %s836 = sld [smem:[#allocation6]]
          %s837 = scalar_lea.smem [#allocation5], 0
          %838 = sst [smem:[%s837]] %s836
        $region64: #{tpu_custom_call.1} parent=47 // pred_fallthru
          _
        %v839 = vlaneseq
        %v840 = vshrl.u32 %v839, 7
        %v841 = vadd.s32 %v840, 8
        %vm842 = vcmp.lt.s32.totalorder %v840, 10
        %vm843 = vcmp.lt.s32.totalorder %v841, 10
        %s844 = smul.u32 %s34, 128
        %v845 = vlaneseq
        %v846 = vand.u32 %v845, 127
        %v847 = vstv %s844
        %v848 = vadd.s32 %v847, %v846
        %vm849 = vcmp.lt.s32.totalorder %v848, 128
        %vm850 = vmand %vm842, %vm849
        %vm851 = vmand %vm843, %vm849
        %v852 = vld [vmem:[#allocation2] sm:$0xf]
        %v853 = vld [vmem:[#allocation2 + $0x4] sm:$0xf]
        %v854 = vld [vmem:[#allocation13] sm:$0xf]
        %v855 = vld [vmem:[#allocation13 + $0x4] sm:$0xf]
        %v856 = vld [vmem:[#allocation13 + $0x8] sm:$0xf]
        %v857 = vld [vmem:[#allocation13 + $0xc] sm:$0xf]
        %v858 = vld [vmem:[#allocation13 + $0x10] sm:$0xf]
        %v859 = vld [vmem:[#allocation13 + $0x14] sm:$0xf]
        %v860 = vld [vmem:[#allocation13 + $0x18] sm:$0xf]
        %v861 = vld [vmem:[#allocation13 + $0x1c] sm:$0xf]
        %v862 = vld [vmem:[#allocation13 + $0x20] sm:$0xf]
        %v863 = vld [vmem:[#allocation13 + $0x24] sm:$0xf]
        %v864 = vld [vmem:[#allocation13 + $0x28] sm:$0xf]
        %v865 = vld [vmem:[#allocation13 + $0x2c] sm:$0xf]
        %v866 = vld [vmem:[#allocation13 + $0x30] sm:$0xf]
        %v867 = vld [vmem:[#allocation13 + $0x34] sm:$0xf]
        %v868 = vld [vmem:[#allocation13 + $0x38] sm:$0xf]
        %v869 = vld [vmem:[#allocation13 + $0x3c] sm:$0xf]
        %v872 = vunpack.c.l.b16 %v852
        %v873 = vunpack.c.l.b16 %v853
        %v874 = vpack.c.b16 %v873, %v872
        %v892 = vunpack.c.l.b16 %v854
        %v893 = vunpack.c.l.b16 %v855
        %v894 = vunpack.c.l.b16 %v856
        %v895 = vunpack.c.l.b16 %v857
        %v896 = vunpack.c.l.b16 %v858
        %v897 = vunpack.c.l.b16 %v859
        %v898 = vunpack.c.l.b16 %v860
        %v899 = vunpack.c.l.b16 %v861
        %v900 = vunpack.c.l.b16 %v862
        %v901 = vunpack.c.l.b16 %v863
        %v902 = vunpack.c.l.b16 %v864
        %v903 = vunpack.c.l.b16 %v865
        %v904 = vunpack.c.l.b16 %v866
        %v905 = vunpack.c.l.b16 %v867
        %v906 = vunpack.c.l.b16 %v868
        %v907 = vunpack.c.l.b16 %v869
        %v908 = vpack.c.b16 %v893, %v892
        %v909 = vpack.c.b16 %v895, %v894
        %v910 = vpack.c.b16 %v897, %v896
        %v911 = vpack.c.b16 %v899, %v898
        %v912 = vpack.c.b16 %v901, %v900
        %v913 = vpack.c.b16 %v903, %v902
        %v914 = vpack.c.b16 %v905, %v904
        %v915 = vpack.c.b16 %v907, %v906
        %924 = vmatpush.bf16.msra.mxu0 %v915
        %925 = vmatpush.bf16.msra.mxu0 %v914
        %926 = vmatpush.bf16.msra.mxu0 %v913
        %927 = vmatpush.bf16.msra.mxu0 %v912
        %928 = vmatpush.bf16.msra.mxu0 %v911
        %929 = vmatpush.bf16.msra.mxu0 %v910
        %930 = vmatpush.bf16.msra.mxu0 %v909
        %931 = vmatpush.bf16.msra.mxu0 %v908
        %932 = vmatmul.bf16.gmra.mxu0 %v874
        %v933 = vpop.f32.mrf.mxu0
        %v934 = vadd.f32 0.0, %v933
        %v935 = vpop.f32.mrf.mxu0
        %v936 = vadd.f32 0.0, %v935
        %937 = vdwg.mxu0
        %v938 = vmul.f32 %v934, 14.285714
        %v939 = vmul.f32 %v936, 14.285714
        %v940 = vmul.f32 %v938, 1.442695
        %v941 = vpow.pop %v940
        %v942 = vmul.f32 %v939, 1.442695
        %v943 = vpow.pop %v942
        // Predicated region
        $region65: #{tpu_custom_call.1} parent=47 // pred_check
          %p944 = pneg %p391
        $region66: #{tpu_custom_call.1} parent=47 // pred_check_branch
          %946 = sbr.rel (%p944) target = $region68
        $region67: #{tpu_custom_call.1} parent=47 // pred_region
          %s947 = sld [smem:[#allocation4]]
          %v948 = vsel %vm850, %v941, 0.0
          %v949 = vsel %vm851, %v943, 0.0
          %v950 = vadd.f32 %v948, %v949
          %951 = vadd.xlane.f32.xlu0 %v950
          %v952 = vpop.xlane.xlu0 %951
          %v953 = vrot.slane %v952, 4
          %v954 = vadd.f32 %v952, %v953
          %v955 = vrot.slane %v954, 2
          %v956 = vadd.f32 %v954, %v955
          %v957 = vrot.slane %v956, 1
          %v958 = vadd.f32 %v956, %v957
          %s959 = vtos %v958
          %s960 = sadd.f32 %s947, %s959
          %s961 = scalar_lea.smem [#allocation4], 0
          %962 = sst [smem:[%s961]] %s960
          // Predicated region
          $region69: #{tpu_custom_call.1} parent=67 // pred_check
            %p963 = pneg %p392
          $region70: #{tpu_custom_call.1} parent=67 // pred_check_branch
            %965 = sbr.rel (%p963) target = $region72
          $region71: #{tpu_custom_call.1} parent=67 // pred_region
            %v966 = vld [vmem:[#allocation3] sm:$0xff]
            %v967 = vld [vmem:[#allocation3 + $0x8] sm:$0xff]
            %v968 = vmul.f32 %v966, 14.285714
            %v969 = vmul.f32 %v967, 14.285714
            %v970 = vmul.f32 %v968, 1.442695
            %v971 = vpow.pop %v970
            %v972 = vmul.f32 %v969, 1.442695
            %v973 = vpow.pop %v972
            %v974 = vsel %vm842, %v971, 0.0
            %v975 = vsel %vm843, %v973, 0.0
            %vm976 = vcmask 7168
            %v977 = vsel %vm976, %v974, 0.0
            %v978 = vsel %vm976, %v975, 0.0
            %v979 = vadd.f32 %v977, %v978
            %980 = vadd.xlane.f32.xlu0 %v979
            %v981 = vpop.xlane.xlu0 %980
            %v982 = vrot.slane %v981, 4
            %v983 = vadd.f32 %v981, %v982
            %v984 = vrot.slane %v983, 2
            %v985 = vadd.f32 %v983, %v984
            %v986 = vrot.slane %v985, 1
            %v987 = vadd.f32 %v985, %v986
            %s988 = vtos %v987
            %s989 = sld [smem:[#allocation4]]
            %s990 = sadd.f32 %s988, %s989
            %v991 = vrcp.pop 1290.0
            %v992 = vmul.f32 1290.0, %v991
            %v993 = vsub.f32 1.0, %v992
            %v994 = vmul.f32 %v991, %v993
            %v995 = vadd.f32 %v991, %v994
            %vm996 = vweird.f32 %v991
            %v997 = vsel %vm996, %v991, %v995
            %s998 = vtos %v997
            %s999 = smul.f32 %s990, %s998
            %s1000 = smul.f32 %s999, 100.0
            %s1001 = scalar_lea.smem [#allocation5], 0
            %1002 = sst [smem:[%s1001]] %s1000
            %s1003 = scalar_lea.smem [#allocation18], 0
            %1004 = sst [smem:[%s1003]] %s1000
          $region72: #{tpu_custom_call.1} parent=67 // pred_fallthru
            _
        $region68: #{tpu_custom_call.1} parent=47 // pred_fallthru
          _
        %p1005 = scmp.eq.s32.totalorder %s33, 1
        // Predicated region
        $region73: #{tpu_custom_call.1} parent=47 // pred_check
          %p1006 = pneg %p1005
        $region74: #{tpu_custom_call.1} parent=47 // pred_check_branch
          %1008 = sbr.rel (%p1006) target = $region76
        $region75: #{tpu_custom_call.1} parent=47 // pred_region
          %s1009 = sld [smem:[#allocation5]]
          %s1010 = smul.f32 %s1009, 1.2800001
          %s1011 = sld [smem:[#allocation4 + $0x1]]
          %v1012 = vstv %s1010
          %v1013 = vadd.f32 %v941, %v1012
          %v1014 = vadd.f32 %v943, %v1012
          %v1015 = vlog2.pop %v1013
          %v1016 = vmul.f32 %v1015, 0.6931472
          %v1017 = vlog2.pop %v1014
          %v1018 = vmul.f32 %v1017, 0.6931472
          %v1019 = vsel %vm850, %v1016, 0.0
          %v1020 = vsel %vm851, %v1018, 0.0
          %v1021 = vadd.f32 %v1019, %v1020
          %1022 = vadd.xlane.f32.xlu0 %v1021
          %v1023 = vpop.xlane.xlu0 %1022
          %v1024 = vrot.slane %v1023, 4
          %v1025 = vadd.f32 %v1023, %v1024
          %v1026 = vrot.slane %v1025, 2
          %v1027 = vadd.f32 %v1025, %v1026
          %v1028 = vrot.slane %v1027, 1
          %v1029 = vadd.f32 %v1027, %v1028
          %s1030 = vtos %v1029
          %s1031 = sadd.f32 %s1011, %s1030
          %s1032 = scalar_lea.smem [#allocation4], 1
          %1033 = sst [smem:[%s1032]] %s1031
          // Predicated region
          $region77: #{tpu_custom_call.1} parent=75 // pred_check
            %p1034 = pneg %p392
          $region78: #{tpu_custom_call.1} parent=75 // pred_check_branch
            %1036 = sbr.rel (%p1034) target = $region80
          $region79: #{tpu_custom_call.1} parent=75 // pred_region
            %v1037 = vld [vmem:[#allocation3] sm:$0xff]
            %v1038 = vld [vmem:[#allocation3 + $0x8] sm:$0xff]
            %v1039 = vmul.f32 %v1037, 14.285714
            %v1040 = vmul.f32 %v1038, 14.285714
            %v1041 = vmul.f32 %v1039, 1.442695
            %v1042 = vpow.pop %v1041
            %v1043 = vmul.f32 %v1040, 1.442695
            %v1044 = vpow.pop %v1043
            %v1045 = vadd.f32 %v1042, %v1012
            %v1046 = vadd.f32 %v1044, %v1012
            %v1047 = vlog2.pop %v1045
            %v1048 = vmul.f32 %v1047, 0.6931472
            %v1049 = vlog2.pop %v1046
            %v1050 = vmul.f32 %v1049, 0.6931472
            %v1051 = vsub.f32 %v1039, %v1048
            %v1052 = vsub.f32 %v1040, %v1050
            %v1053 = vsel %vm842, %v1051, 0.0
            %v1054 = vsel %vm843, %v1052, 0.0
            %vm1055 = vcmask 7168
            %v1056 = vsel %vm1055, %v1053, 0.0
            %v1057 = vsel %vm1055, %v1054, 0.0
            %v1058 = vadd.f32 %v1056, %v1057
            %1059 = vadd.xlane.f32.xlu0 %v1058
            %v1060 = vpop.xlane.xlu0 %1059
            %v1061 = vrot.slane %v1060, 4
            %v1062 = vadd.f32 %v1060, %v1061
            %v1063 = vrot.slane %v1062, 2
            %v1064 = vadd.f32 %v1062, %v1063
            %v1065 = vrot.slane %v1064, 1
            %v1066 = vadd.f32 %v1064, %v1065
            %s1067 = vtos %v1066
            %s1068 = smul.f32 %s1009, 1.28
            %v1069 = vstv %s1068
            %v1070 = vlog2.pop %v1069
            %v1071 = vmul.f32 %v1070, 0.6931472
            %s1072 = vtos %v1071
            %s1073 = smul.f32 %s1072, 1280.0
            %s1074 = sld [smem:[#allocation4 + $0x1]]
            %s1075 = ssub.f32 %s1073, %s1074
            %s1076 = sadd.f32 %s1067, %s1075
            %s1077 = ssub.f32 0.0, %s1076
            %v1078 = vrcp.pop 10.0
            %v1079 = vmul.f32 10.0, %v1078
            %v1080 = vsub.f32 1.0, %v1079
            %v1081 = vmul.f32 %v1078, %v1080
            %v1082 = vadd.f32 %v1078, %v1081
            %vm1083 = vweird.f32 %v1078
            %v1084 = vsel %vm1083, %v1078, %v1082
            %s1085 = vtos %v1084
            %s1086 = smul.f32 %s1077, %s1085
            %s1087 = scalar_lea.smem [#allocation17], 0
            %1088 = sst [smem:[%s1087]] %s1086
          $region80: #{tpu_custom_call.1} parent=75 // pred_fallthru
            _
        $region76: #{tpu_custom_call.1} parent=47 // pred_fallthru
          _
        // Predicated region
        $region81: #{tpu_custom_call.1} parent=47 // pred_check
          %p1089 = pneg %p206
        $region82: #{tpu_custom_call.1} parent=47 // pred_check_branch
          %1091 = sbr.rel (%p1089) target = $region84
        $region83: #{tpu_custom_call.1} parent=47 // pred_region
          %1093 = vsyncadd [#allocation9], 0
          %s1094 = sshll.u32 [#allocation14], 4
          %s1095 = int_to_ptr.vmem [resolvable:$true] %s1094
          %s1096 = sshll.u32 %s7, 4
          %s1097 = int_to_ptr.hbm [resolvable:$true] %s1096
          %1102 = dma.vmem_to_hbm [thread:$0]  %s1095, 256, %s1097, [#allocation9], 128, 128, 8
        $region84: #{tpu_custom_call.1} parent=47 // pred_fallthru
          _
        // Predicated region
        $region85: #{tpu_custom_call.1} parent=47 // pred_check
          %p1103 = pneg %p227
        $region86: #{tpu_custom_call.1} parent=47 // pred_check_branch
          %1105 = sbr.rel (%p1103) target = $region88
        $region87: #{tpu_custom_call.1} parent=47 // pred_region
          %1107 = vsyncadd [#allocation16], 0
          %s1109 = sshll.u32 [#allocation15], 4
          %s1110 = int_to_ptr.vmem [resolvable:$true] %s1109
          %s1111 = sshll.u32 %s8, 4
          %s1112 = int_to_ptr.hbm [resolvable:$true] %s1111
          %1114 = dma.vmem_to_hbm [thread:$0]  %s1110, 128, %s1112, [#allocation16]
        $region88: #{tpu_custom_call.1} parent=47 // pred_fallthru
          _
        // Predicated region
        $region89: #{tpu_custom_call.1} parent=47 // pred_check
          %p1115 = pneg %p248
        $region90: #{tpu_custom_call.1} parent=47 // pred_check_branch
          %1117 = sbr.rel (%p1115) target = $region92
        $region91: #{tpu_custom_call.1} parent=47 // pred_region
          %1119 = vsyncadd [#allocation10], 0
          %s1121 = sshll.u32 %s9, 4
          %s1122 = int_to_ptr.hbm [resolvable:$true] %s1121
          %1124 = dma.smem_to_hbm [#allocation17], 16, %s1122, [#allocation10]
        $region92: #{tpu_custom_call.1} parent=47 // pred_fallthru
          _
        // Predicated region
        $region93: #{tpu_custom_call.1} parent=47 // pred_check
          %p1125 = pneg %p269
        $region94: #{tpu_custom_call.1} parent=47 // pred_check_branch
          %1127 = sbr.rel (%p1125) target = $region96
        $region95: #{tpu_custom_call.1} parent=47 // pred_region
          %1129 = vsyncadd [#allocation19], 0
          %s1131 = sshll.u32 %s10, 4
          %s1132 = int_to_ptr.hbm [resolvable:$true] %s1131
          %1134 = dma.smem_to_hbm [#allocation18], 16, %s1132, [#allocation19]
        $region96: #{tpu_custom_call.1} parent=47 // pred_fallthru
          _
        // Predicated region
        $region97: #{tpu_custom_call.1} parent=47 // pred_check
          %p1135 = pneg %p206
        $region98: #{tpu_custom_call.1} parent=47 // pred_check_branch
          %1137 = sbr.rel (%p1135) target = $region100
        $region99: #{tpu_custom_call.1} parent=47 // pred_region
          %1139 = dma.done [#allocation9], 256
        $region100: #{tpu_custom_call.1} parent=47 // pred_fallthru
          _
        // Predicated region
        $region101: #{tpu_custom_call.1} parent=47 // pred_check
          %p1140 = pneg %p227
        $region102: #{tpu_custom_call.1} parent=47 // pred_check_branch
          %1142 = sbr.rel (%p1140) target = $region104
        $region103: #{tpu_custom_call.1} parent=47 // pred_region
          %1144 = dma.done [#allocation16], 128
        $region104: #{tpu_custom_call.1} parent=47 // pred_fallthru
          _
        // Predicated region
        $region105: #{tpu_custom_call.1} parent=47 // pred_check
          %p1145 = pneg %p248
        $region106: #{tpu_custom_call.1} parent=47 // pred_check_branch
          %1147 = sbr.rel (%p1145) target = $region108
        $region107: #{tpu_custom_call.1} parent=47 // pred_region
          %1149 = dma.done [#allocation10], 16
        $region108: #{tpu_custom_call.1} parent=47 // pred_fallthru
          _
        // Predicated region
        $region109: #{tpu_custom_call.1} parent=47 // pred_check
          %p1150 = pneg %p269
        $region110: #{tpu_custom_call.1} parent=47 // pred_check_branch
          %1152 = sbr.rel (%p1150) target = $region112
        $region111: #{tpu_custom_call.1} parent=47 // pred_region
          %1154 = dma.done [#allocation19], 16
        $region112: #{tpu_custom_call.1} parent=47 // pred_fallthru
          _
        %1155 = sfence
      $region48: #{tpu_custom_call.1} parent=5 // pred_fallthru
        _
      %p1156 = scmp.le.s32.totalorder 2, %s24
      // Predicated region
      $region113: #{tpu_custom_call.1} parent=5 // pred_check
        %p1157 = pneg %p1156
      $region114: #{tpu_custom_call.1} parent=5 // pred_check_branch
        %1159 = sbr.rel (%p1157) target = $region116
      $region115: #{tpu_custom_call.1} parent=5 // pred_region
        %s1160 = ssub.s32 %s24, 2
      $region116: #{tpu_custom_call.1} parent=5 // pred_fallthru
        _
    $region6: #{tpu_custom_call.1} parent=1 // loop_footer
      %s28 = sadd.s32 1, %s24
    $region7: #{tpu_custom_call.1} parent=1 // loop_footer_branch
      %23 = sbr.rel target = $region3
    $region8: #{tpu_custom_call.1} parent=1 // loop_exit
      _
    %1161 = vsyncpa [#allocation8], 1
    %s1162 = scalar_lea.sflag [#allocation8], 1
    %1163 = vsyncpa %s1162, 1
    %1164 = vsyncpa [#allocation12], 1
    %1165 = vsyncpa [#allocation9], 1
    %s1166 = scalar_lea.sflag [#allocation9], 1
    %1167 = vsyncpa %s1166, 1
    %1168 = vsyncpa [#allocation16], 1
    %1169 = vsyncpa [#allocation10], 1
    %s1170 = scalar_lea.sflag [#allocation10], 1
    %1171 = vsyncpa %s1170, 1
    %1172 = vsyncpa [#allocation19], 1

</llo_original>
